<compile_context>
chip_gen: v7x
topology: tpu7x:2x2x1
jax: 0.10.0
libtpu: 0.0.40
codegen_flags: <defaults>
</compile_context>

<pallas_src>
import functools
import numpy as np
import jax
import jax.numpy as jnp
from jax import lax
from jax.experimental import pallas as pl
from jax.experimental.pallas import tpu as pltpu

EPS = 1e-5


def _lane_shift(v, d):
    """out[:, j] = v[:, j + d] via an XLU lane rotation.

    Wrap-around columns only ever land in masked / garbage lane regions
    (each sample's slot has >= qmax spare columns past Lout), see callers.
    """
    if d == 0:
        return v
    return pltpu.roll(v, shift=(-d) % v.shape[-1], axis=1)


def _basic_block_kernel(*refs, K, P, stride, Lout, slot, G,
                        has_downsample, fuse_conv1, compute_dtype):
    if has_downsample:
        (xph_ref, pos_ref, w1_ref, t1_ref, w2_ref, t2_ref,
         wf1_ref, bf1_ref, wf2_ref, bf2_ref, wd_ref, td_ref, o_ref) = refs
    else:
        (xph_ref, pos_ref, w1_ref, t1_ref, w2_ref, t2_ref,
         wf1_ref, bf1_ref, wf2_ref, bf2_ref, o_ref) = refs

    f32 = jnp.float32
    phases = [xph_ref[r] for r in range(stride)]          # each (Cin, W), compute dtype

    # ---- conv1 (+ folded bn1 scale) + relu ----
    # tap k of the stride-s conv == phase (k % s) shifted left by (k // s)
    if fuse_conv1:
        taps1 = [_lane_shift(phases[k % stride], k // stride) for k in range(K)]
        p1 = jnp.concatenate(taps1, axis=0)               # (K*Cin, W)
        pre1 = jnp.dot(w1_ref[...], p1, preferred_element_type=f32)
    else:
        pre1 = None
        for k in range(K):
            tap = _lane_shift(phases[k % stride], k // stride)
            c = jnp.dot(w1_ref[k], tap, preferred_element_type=f32)
            pre1 = c if pre1 is None else pre1 + c
    out1 = jnp.maximum(pre1 + t1_ref[...], 0.0)           # (Cout, W) f32
    out1c = out1.astype(compute_dtype)

    # ---- conv2 (stride 1, "same" zero padding) + bn2: K accumulated dots ----
    pos = pos_ref[...]                                    # (1, W) within-slot column index
    acc2 = None
    for k in range(K):
        d = k - P
        m = jnp.logical_and(pos + d >= 0, pos + d < Lout)  # conv zero-padding mask
        tap = jnp.where(m, _lane_shift(out1c, d), 0.0)
        c = jnp.dot(w2_ref[k], tap, preferred_element_type=f32)
        acc2 = c if acc2 is None else acc2 + c
    out2 = acc2 + t2_ref[...]                             # (Cout, W) f32

    # ---- residual path ----
    if has_downsample:
        # x[:, ::stride] == phase (P % stride) shifted by (P // stride)
        idn_in = _lane_shift(phases[P % stride], P // stride)
        idn = jnp.dot(wd_ref[...], idn_in, preferred_element_type=f32) + td_ref[...]
    else:
        # identity (stride == 1, Cin == Cout): un-padded x == padded x shifted by P
        idn = _lane_shift(phases[0], P).astype(f32)

    # ---- SE block: per-sample masked mean pool (lane reduction), two tiny FCs
    #      batched over the G samples, per-sample VPU broadcast gate.
    #      The 1/Lout mean scale is folded into wf1 on the host. ----
    valid = lax.broadcasted_iota(jnp.int32, (1, slot), 1) < Lout
    pooled_cols = []
    for g in range(G):
        o2g = out2[:, g * slot:(g + 1) * slot]
        pooled_cols.append(jnp.sum(jnp.where(valid, o2g, 0.0), axis=1, keepdims=True))
    pooled = pooled_cols[0] if G == 1 else jnp.concatenate(pooled_cols, axis=1)   # (Cout, G)
    h = jnp.maximum(
        jnp.dot(wf1_ref[...], pooled, preferred_element_type=f32) + bf1_ref[...], 0.0)
    gate = jax.nn.sigmoid(
        jnp.dot(wf2_ref[...], h, preferred_element_type=f32) + bf2_ref[...])      # (Cout, G)

    # ---- gate * out2 + residual, final relu; store in (G, Cout, slot) layout ----
    for g in range(G):
        o2g = out2[:, g * slot:(g + 1) * slot]
        idng = idn[:, g * slot:(g + 1) * slot]
        o_ref[g] = jnp.maximum(o2g * gate[:, g:g + 1] + idng, 0.0)


def basic_block_forward(x, params, *, kernel_size=3, stride=1,
                        compute_dtype=jnp.bfloat16, lane_target=2048,
                        vmem_budget_bytes=20 * 1024 * 1024):
    B, Cin, L = x.shape
    K = kernel_size
    P = K // 2
    Cout = params["w1"].shape[0]
    Cr = params["wf1"].shape[0]
    Lout = (L + 2 * P - K) // stride + 1
    has_ds = bool(params["has_downsample"])
    if not has_ds:
        assert stride == 1 and Cin == Cout, (
            "identity residual requires stride == 1 and in_channels == out_channels")

    # ---- fold eval-mode BN (and conv bias) into per-channel scale + shift ----
    # (constant transform; folded away under jit with constant params)
    def fold(bias, stats):
        gamma, beta, mean, var = stats
        s = gamma * jax.lax.rsqrt(var + EPS)
        t = beta + (bias - mean) * s
        return s, t.reshape(-1, 1)

    s1, t1 = fold(params["b1"], params["bn1"])
    s2, t2 = fold(params["b2"], params["bn2"])

    fuse_conv1 = (K * Cin) <= 256
    if fuse_conv1:
        # (Cout, K*Cin), tap-major rows, matching the in-kernel concat order
        w1f = (jnp.transpose(params["w1"], (0, 2, 1)).reshape(Cout, K * Cin)
               * s1[:, None]).astype(compute_dtype)
    else:
        w1f = (jnp.transpose(params["w1"], (2, 0, 1))
               * s1[None, :, None]).astype(compute_dtype)          # (K, Cout, Cin)
    w2k = (jnp.transpose(params["w2"], (2, 0, 1))
           * s2[None, :, None]).astype(compute_dtype)              # (K, Cout, Cout)
    if has_ds:
        sd, td = fold(params["bd"], params["bnd"])
        wdf = (params["wd"][:, :, 0] * sd[:, None]).astype(compute_dtype)
    wf1 = params["wf1"] * (1.0 / Lout)                             # fold SE mean scale

    # ---- lane-dense packing: G samples per grid step, 128-aligned slot each ----
    qmax = (K - 1) // stride
    Lph = Lout + qmax                              # columns needed per sample (taps included)
    slot = ((Lph + 127) // 128) * 128              # lane-aligned slot -> unmasked stores
    cb = jnp.dtype(compute_dtype).itemsize
    per_lane = (2 * stride * Cin * cb              # double-buffered input block
                + 2 * Cout * 4                     # double-buffered output block
                + (K * Cin * cb if fuse_conv1 else 2 * Cin * cb)   # p1 / tap temp
                + Cout * (4 + cb)                  # out1 f32 + compute-dtype copy
                + 2 * Cout * cb                    # conv2 tap temporaries
                + 3 * Cout * 4)                    # out2 acc / idn / gated temporaries
    w_max = max(slot, vmem_budget_bytes // max(per_lane, 1))
    w_target = min(lane_target, (w_max // 128) * 128)
    G = int(max(1, min(w_target // slot, B)))
    n_grp = -(-B // G)
    Bpad = n_grp * G
    W = G * slot                                   # lanes per grid step

    # ---- phase-split the padded input so in-kernel tap reads are lane shifts ----
    x_pad = jnp.pad(x, ((0, 0), (0, 0), (P, P)))                   # (B, Cin, L+2P)
    Lpad = L + 2 * P
    Lpp = -(-Lpad // stride) * stride
    x_pad = jnp.pad(x_pad, ((0, Bpad - B), (0, 0), (0, Lpp - Lpad)))
    nu = Lpp // stride
    xph = x_pad.reshape(Bpad, Cin, nu, stride)                     # [b, c, u, r]
    xph = jnp.transpose(xph, (3, 1, 0, 2))                         # (stride, Cin, Bpad, nu)
    xph = jnp.pad(xph, ((0, 0), (0, 0), (0, 0), (0, max(0, slot - nu))))[:, :, :, :slot]
    xph = xph.reshape(stride, Cin, Bpad * slot).astype(compute_dtype)

    # tiny host constant: within-slot column index (conv2 zero-padding mask)
    pos = jnp.asarray(np.tile(np.arange(slot, dtype=np.int32), G)[None, :])    # (1, W)

    inputs = [xph, pos,
              w1f, t1, w2k, t2,
              wf1, params["bf1"].reshape(Cr, 1),
              params["wf2"], params["bf2"].reshape(Cout, 1)]
    if has_ds:
        inputs += [wdf, td]

    kernel = functools.partial(
        _basic_block_kernel, K=K, P=P, stride=stride, Lout=Lout, slot=slot, G=G,
        has_downsample=has_ds, fuse_conv1=fuse_conv1, compute_dtype=compute_dtype)

    # explicit scoped-VMEM limit from the computed footprint
    const_bytes = sum(int(a.size) * a.dtype.itemsize for a in inputs[1:])
    needed = per_lane * W + 2 * const_bytes
    vmem_limit = int(min(64 * 1024 * 1024, max(32 * 1024 * 1024, int(needed * 1.5))))

    out_shape = jax.ShapeDtypeStruct((Bpad, Cout, slot), jnp.float32)

    def build(single_buffer_consts):
        pm = pl.Buffered(1) if single_buffer_consts else None

        def rep(a):  # replicated (constant-index) block == full array
            return pl.BlockSpec(a.shape, lambda gi, nd=a.ndim: (0,) * nd,
                                pipeline_mode=pm)

        in_specs = ([pl.BlockSpec((stride, Cin, W), lambda gi: (0, 0, gi))]
                    + [rep(a) for a in inputs[1:]])
        return pl.pallas_call(
            kernel,
            out_shape=out_shape,
            grid=(n_grp,),
            in_specs=in_specs,
            out_specs=pl.BlockSpec((G, Cout, slot), lambda gi: (gi, 0, 0)),
            compiler_params=pltpu.CompilerParams(
                dimension_semantics=("parallel",),
                vmem_limit_bytes=vmem_limit))

    try:
        out = build(True)(*inputs)       # constants single-buffered via pl.Buffered(1)
    except Exception:                    # fallback: default double-buffered constants
        out = build(False)(*inputs)

    # (Bpad, Cout, slot) -> crop garbage lanes / padded samples, no transpose needed
    return out[:B, :, :Lout]


def init_params(key, in_channels, out_channels, kernel_size=3, stride=1, reduction=16):
    K = kernel_size
    Cr = max(out_channels // reduction, 1)
    ks = jax.random.split(key, 24)

    def w(k, shape, scale=0.1):
        return scale * jax.random.normal(k, shape, jnp.float32)

    def bn_stats(k0, k1, k2, k3, c):
        return (1.0 + 0.1 * jax.random.normal(ks[k0], (c,), jnp.float32),   # gamma
                0.1 * jax.random.normal(ks[k1], (c,), jnp.float32),         # beta
                0.1 * jax.random.normal(ks[k2], (c,), jnp.float32),         # running_mean
                1.0 + 0.2 * jax.random.uniform(ks[k3], (c,), jnp.float32))  # running_var

    params = dict(
        w1=w(ks[0], (out_channels, in_channels, K)),
        b1=w(ks[1], (out_channels,)),
        bn1=bn_stats(2, 3, 4, 5, out_channels),
        w2=w(ks[6], (out_channels, out_channels, K)),
        b2=w(ks[7], (out_channels,)),
        bn2=bn_stats(8, 9, 10, 11, out_channels),
        wf1=w(ks[12], (Cr, out_channels), 0.2),
        bf1=w(ks[13], (Cr,), 0.1),
        wf2=w(ks[14], (out_channels, Cr), 0.2),
        bf2=w(ks[15], (out_channels,), 0.1),
        wd=w(ks[16], (out_channels, in_channels, 1)),
        bd=w(ks[17], (out_channels,)),
        bnd=bn_stats(18, 19, 20, 21, out_channels),
        has_downsample=(in_channels != out_channels or stride != 1),
    )
    return params


def reference_forward(x, params, *, kernel_size=3, stride=1):
    """Pure-JAX reference (eval-mode BN) used only to verify the Pallas kernel."""
    K = kernel_size
    P = K // 2

    def conv(x, w, b, s, pad):
        y = jax.lax.conv_general_dilated(
            x, w, window_strides=(s,), padding=[(pad, pad)],
            dimension_numbers=("NCH", "OIH", "NCH"))
        return y + b[None, :, None]

    def bn(x, stats):
        gamma, beta, mean, var = stats
        return ((x - mean[None, :, None]) * jax.lax.rsqrt(var[None, :, None] + EPS)
                * gamma[None, :, None] + beta[None, :, None])

    out = jax.nn.relu(bn(conv(x, params["w1"], params["b1"], stride, P), params["bn1"]))
    out = bn(conv(out, params["w2"], params["b2"], 1, P), params["bn2"])
    pooled = out.mean(axis=2)                                   # (B, Cout)
    h = jax.nn.relu(pooled @ params["wf1"].T + params["bf1"])
    gate = jax.nn.sigmoid(h @ params["wf2"].T + params["bf2"])
    out = out * gate[:, :, None]
    if params["has_downsample"]:
        identity = bn(conv(x, params["wd"], params["bd"], stride, 0), params["bnd"])
    else:
        identity = x
    return jax.nn.relu(out + identity)


if __name__ == "__main__":
    key = jax.random.PRNGKey(0)
    kx, kp, kx2, kp2 = jax.random.split(key, 4)

    # --- case 1: downsample path (Cin != Cout, stride 2) ---
    B, Cin, Cout, L, K, stride = 2, 16, 32, 16, 3, 2
    x = jax.random.normal(kx, (B, Cin, L), jnp.float32)
    params = init_params(kp, Cin, Cout, kernel_size=K, stride=stride)
    ref = reference_forward(x, params, kernel_size=K, stride=stride)
    Lout = (L + 2 * (K // 2) - K) // stride + 1

    # f32 matmuls: tight correctness check
    out_f32 = jax.block_until_ready(
        basic_block_forward(x, params, kernel_size=K, stride=stride,
                            compute_dtype=jnp.float32))
    assert out_f32.shape == (B, Cout, Lout), out_f32.shape
    np.testing.assert_allclose(np.asarray(out_f32), np.asarray(ref), rtol=5e-3, atol=5e-3)

    # default bf16 matmul operands (MXU-native), f32 accumulation: looser check
    out_bf16 = jax.block_until_ready(
        basic_block_forward(x, params, kernel_size=K, stride=stride))
    np.testing.assert_allclose(np.asarray(out_bf16), np.asarray(ref), rtol=1e-1, atol=1e-1)

    # --- case 2: identity residual (Cin == Cout, stride 1) ---
    B2, C2, L2 = 2, 32, 16
    x2 = jax.random.normal(kx2, (B2, C2, L2), jnp.float32)
    params2 = init_params(kp2, C2, C2, kernel_size=3, stride=1)
    ref2 = reference_forward(x2, params2, kernel_size=3, stride=1)
    out2 = jax.block_until_ready(
        basic_block_forward(x2, params2, kernel_size=3, stride=1,
                            compute_dtype=jnp.float32))
    np.testing.assert_allclose(np.asarray(out2), np.asarray(ref2), rtol=5e-3, atol=5e-3)

    print("KERNEL_OK")
</pallas_src>

<mosaic_0001>
module attributes {stable_mosaic.version = 11 : i64} {
  func.func @_basic_block_kernel(%arg0: i32, %arg1: memref<2x16x256xf32, #tpu.memory_space<vmem>>, %arg2: memref<1x256xi32, #tpu.memory_space<vmem>>, %arg3: memref<32x48xf32, #tpu.memory_space<vmem>>, %arg4: memref<32x1xf32, #tpu.memory_space<vmem>>, %arg5: memref<3x32x32xf32, #tpu.memory_space<vmem>>, %arg6: memref<32x1xf32, #tpu.memory_space<vmem>>, %arg7: memref<2x32xf32, #tpu.memory_space<vmem>>, %arg8: memref<2x1xf32, #tpu.memory_space<vmem>>, %arg9: memref<32x2xf32, #tpu.memory_space<vmem>>, %arg10: memref<32x1xf32, #tpu.memory_space<vmem>>, %arg11: memref<32x16xf32, #tpu.memory_space<vmem>>, %arg12: memref<32x1xf32, #tpu.memory_space<vmem>>, %arg13: memref<2x32x128xf32, #tpu.memory_space<vmem>>) attributes {dimension_semantics = [#tpu.dimension_semantics<parallel>], iteration_bounds = array<i64: 1>, scalar_prefetch = 0 : i64, scratch_operands = 0 : i64, tpu.core_type = #tpu.core_type<tc>, window_params = [{transform_indices = @transform_0, window_bounds = array<i64: 2, 16, 256>}, {pipeline_mode = #tpu.pipeline_mode<synchronous>, transform_indices = @transform_1, window_bounds = array<i64: 1, 256>}, {pipeline_mode = #tpu.pipeline_mode<synchronous>, transform_indices = @transform_2, window_bounds = array<i64: 32, 48>}, {pipeline_mode = #tpu.pipeline_mode<synchronous>, transform_indices = @transform_3, window_bounds = array<i64: 32, 1>}, {pipeline_mode = #tpu.pipeline_mode<synchronous>, transform_indices = @transform_4, window_bounds = array<i64: 3, 32, 32>}, {pipeline_mode = #tpu.pipeline_mode<synchronous>, transform_indices = @transform_5, window_bounds = array<i64: 32, 1>}, {pipeline_mode = #tpu.pipeline_mode<synchronous>, transform_indices = @transform_6, window_bounds = array<i64: 2, 32>}, {pipeline_mode = #tpu.pipeline_mode<synchronous>, transform_indices = @transform_7, window_bounds = array<i64: 2, 1>}, {pipeline_mode = #tpu.pipeline_mode<synchronous>, transform_indices = @transform_8, window_bounds = array<i64: 32, 2>}, {pipeline_mode = #tpu.pipeline_mode<synchronous>, transform_indices = @transform_9, window_bounds = array<i64: 32, 1>}, {pipeline_mode = #tpu.pipeline_mode<synchronous>, transform_indices = @transform_10, window_bounds = array<i64: 32, 16>}, {pipeline_mode = #tpu.pipeline_mode<synchronous>, transform_indices = @transform_11, window_bounds = array<i64: 32, 1>}, {transform_indices = @transform_12, window_bounds = array<i64: 2, 32, 128>}]} {
    %c0 = arith.constant 0 : index
    %c0_0 = arith.constant 0 : index
    %c0_1 = arith.constant 0 : index
    %0 = vector.load %arg1[%c0, %c0_0, %c0_1] : memref<2x16x256xf32, #tpu.memory_space<vmem>>, vector<1x16x256xf32>
    %1 = vector.shape_cast %0 : vector<1x16x256xf32> to vector<16x256xf32>
    %c1 = arith.constant 1 : index
    %c0_2 = arith.constant 0 : index
    %c0_3 = arith.constant 0 : index
    %2 = vector.load %arg1[%c1, %c0_2, %c0_3] : memref<2x16x256xf32, #tpu.memory_space<vmem>>, vector<1x16x256xf32>
    %3 = vector.shape_cast %2 : vector<1x16x256xf32> to vector<16x256xf32>
    %c255_i32 = arith.constant 255 : i32
    %4 = tpu.dynamic_rotate %1 by %c255_i32 dim 1 : vector<16x256xf32>, i32 -> vector<16x256xf32>
    %5 = tpu.concatenate %1, %3, %4 in 0 : vector<16x256xf32>, vector<16x256xf32>, vector<16x256xf32> -> vector<48x256xf32>
    %c0_4 = arith.constant 0 : index
    %c0_5 = arith.constant 0 : index
    %6 = vector.load %arg3[%c0_4, %c0_5] : memref<32x48xf32, #tpu.memory_space<vmem>>, vector<32x48xf32>
    %cst = arith.constant dense<0.000000e+00> : vector<32x256xf32>
    %7 = tpu.matmul %6, %5, %cst {dimension_numbers = #tpu.dot_dimension_numbers<[1], [0], [0], [1], [0, 0, 1, 1], [], []>} : vector<32x48xf32>, vector<48x256xf32>, vector<32x256xf32> -> vector<32x256xf32>
    %c0_6 = arith.constant 0 : index
    %c0_7 = arith.constant 0 : index
    %8 = vector.load %arg4[%c0_6, %c0_7] : memref<32x1xf32, #tpu.memory_space<vmem>>, vector<32x1xf32>
    %9 = vector.broadcast %8 : vector<32x1xf32> to vector<32x256xf32>
    %10 = arith.addf %7, %9 : vector<32x256xf32>
    %cst_8 = arith.constant 0.000000e+00 : f32
    %11 = vector.broadcast %cst_8 : f32 to vector<32x256xf32>
    %12 = arith.maximumf %10, %11 : vector<32x256xf32>
    %c0_9 = arith.constant 0 : index
    %c0_10 = arith.constant 0 : index
    %13 = vector.load %arg2[%c0_9, %c0_10] : memref<1x256xi32, #tpu.memory_space<vmem>>, vector<1x256xi32>
    %c-1_i32 = arith.constant -1 : i32
    %14 = vector.broadcast %c-1_i32 : i32 to vector<1x256xi32>
    %15 = arith.addi %13, %14 : vector<1x256xi32>
    %c0_i32 = arith.constant 0 : i32
    %16 = vector.broadcast %c0_i32 : i32 to vector<1x256xi32>
    %17 = arith.cmpi sge, %15, %16 : vector<1x256xi32>
    %c-1_i32_11 = arith.constant -1 : i32
    %18 = vector.broadcast %c-1_i32_11 : i32 to vector<1x256xi32>
    %19 = arith.addi %13, %18 : vector<1x256xi32>
    %c8_i32 = arith.constant 8 : i32
    %20 = vector.broadcast %c8_i32 : i32 to vector<1x256xi32>
    %21 = arith.cmpi slt, %19, %20 : vector<1x256xi32>
    %22 = arith.andi %17, %21 : vector<1x256xi1>
    %c1_i32 = arith.constant 1 : i32
    %23 = tpu.dynamic_rotate %12 by %c1_i32 dim 1 : vector<32x256xf32>, i32 -> vector<32x256xf32>
    %cst_12 = arith.constant 0.000000e+00 : f32
    %24 = vector.shape_cast %22 : vector<1x256xi1> to vector<1x256xi1>
    %25 = vector.broadcast %24 : vector<1x256xi1> to vector<32x256xi1>
    %26 = vector.broadcast %cst_12 : f32 to vector<32x256xf32>
    %27 = arith.select %25, %23, %26 : vector<32x256xi1>, vector<32x256xf32>
    %c0_13 = arith.constant 0 : index
    %c0_14 = arith.constant 0 : index
    %c0_15 = arith.constant 0 : index
    %28 = vector.load %arg5[%c0_13, %c0_14, %c0_15] : memref<3x32x32xf32, #tpu.memory_space<vmem>>, vector<1x32x32xf32>
    %29 = vector.shape_cast %28 : vector<1x32x32xf32> to vector<32x32xf32>
    %cst_16 = arith.constant dense<0.000000e+00> : vector<32x256xf32>
    %30 = tpu.matmul %29, %27, %cst_16 {dimension_numbers = #tpu.dot_dimension_numbers<[1], [0], [0], [1], [0, 0, 1, 1], [], []>} : vector<32x32xf32>, vector<32x256xf32>, vector<32x256xf32> -> vector<32x256xf32>
    %c0_i32_17 = arith.constant 0 : i32
    %31 = vector.broadcast %c0_i32_17 : i32 to vector<1x256xi32>
    %32 = arith.addi %13, %31 : vector<1x256xi32>
    %c0_i32_18 = arith.constant 0 : i32
    %33 = vector.broadcast %c0_i32_18 : i32 to vector<1x256xi32>
    %34 = arith.cmpi sge, %32, %33 : vector<1x256xi32>
    %c0_i32_19 = arith.constant 0 : i32
    %35 = vector.broadcast %c0_i32_19 : i32 to vector<1x256xi32>
    %36 = arith.addi %13, %35 : vector<1x256xi32>
    %c8_i32_20 = arith.constant 8 : i32
    %37 = vector.broadcast %c8_i32_20 : i32 to vector<1x256xi32>
    %38 = arith.cmpi slt, %36, %37 : vector<1x256xi32>
    %39 = arith.andi %34, %38 : vector<1x256xi1>
    %cst_21 = arith.constant 0.000000e+00 : f32
    %40 = vector.shape_cast %39 : vector<1x256xi1> to vector<1x256xi1>
    %41 = vector.broadcast %40 : vector<1x256xi1> to vector<32x256xi1>
    %42 = vector.broadcast %cst_21 : f32 to vector<32x256xf32>
    %43 = arith.select %41, %12, %42 : vector<32x256xi1>, vector<32x256xf32>
    %c1_22 = arith.constant 1 : index
    %c0_23 = arith.constant 0 : index
    %c0_24 = arith.constant 0 : index
    %44 = vector.load %arg5[%c1_22, %c0_23, %c0_24] : memref<3x32x32xf32, #tpu.memory_space<vmem>>, vector<1x32x32xf32>
    %45 = vector.shape_cast %44 : vector<1x32x32xf32> to vector<32x32xf32>
    %cst_25 = arith.constant dense<0.000000e+00> : vector<32x256xf32>
    %46 = tpu.matmul %45, %43, %cst_25 {dimension_numbers = #tpu.dot_dimension_numbers<[1], [0], [0], [1], [0, 0, 1, 1], [], []>} : vector<32x32xf32>, vector<32x256xf32>, vector<32x256xf32> -> vector<32x256xf32>
    %47 = arith.addf %30, %46 : vector<32x256xf32>
    %c1_i32_26 = arith.constant 1 : i32
    %48 = vector.broadcast %c1_i32_26 : i32 to vector<1x256xi32>
    %49 = arith.addi %13, %48 : vector<1x256xi32>
    %c0_i32_27 = arith.constant 0 : i32
    %50 = vector.broadcast %c0_i32_27 : i32 to vector<1x256xi32>
    %51 = arith.cmpi sge, %49, %50 : vector<1x256xi32>
    %c1_i32_28 = arith.constant 1 : i32
    %52 = vector.broadcast %c1_i32_28 : i32 to vector<1x256xi32>
    %53 = arith.addi %13, %52 : vector<1x256xi32>
    %c8_i32_29 = arith.constant 8 : i32
    %54 = vector.broadcast %c8_i32_29 : i32 to vector<1x256xi32>
    %55 = arith.cmpi slt, %53, %54 : vector<1x256xi32>
    %56 = arith.andi %51, %55 : vector<1x256xi1>
    %c255_i32_30 = arith.constant 255 : i32
    %57 = tpu.dynamic_rotate %12 by %c255_i32_30 dim 1 : vector<32x256xf32>, i32 -> vector<32x256xf32>
    %cst_31 = arith.constant 0.000000e+00 : f32
    %58 = vector.shape_cast %56 : vector<1x256xi1> to vector<1x256xi1>
    %59 = vector.broadcast %58 : vector<1x256xi1> to vector<32x256xi1>
    %60 = vector.broadcast %cst_31 : f32 to vector<32x256xf32>
    %61 = arith.select %59, %57, %60 : vector<32x256xi1>, vector<32x256xf32>
    %c2 = arith.constant 2 : index
    %c0_32 = arith.constant 0 : index
    %c0_33 = arith.constant 0 : index
    %62 = vector.load %arg5[%c2, %c0_32, %c0_33] : memref<3x32x32xf32, #tpu.memory_space<vmem>>, vector<1x32x32xf32>
    %63 = vector.shape_cast %62 : vector<1x32x32xf32> to vector<32x32xf32>
    %cst_34 = arith.constant dense<0.000000e+00> : vector<32x256xf32>
    %64 = tpu.matmul %63, %61, %cst_34 {dimension_numbers = #tpu.dot_dimension_numbers<[1], [0], [0], [1], [0, 0, 1, 1], [], []>} : vector<32x32xf32>, vector<32x256xf32>, vector<32x256xf32> -> vector<32x256xf32>
    %65 = arith.addf %47, %64 : vector<32x256xf32>
    %c0_35 = arith.constant 0 : index
    %c0_36 = arith.constant 0 : index
    %66 = vector.load %arg6[%c0_35, %c0_36] : memref<32x1xf32, #tpu.memory_space<vmem>>, vector<32x1xf32>
    %67 = vector.broadcast %66 : vector<32x1xf32> to vector<32x256xf32>
    %68 = arith.addf %65, %67 : vector<32x256xf32>
    %c0_37 = arith.constant 0 : index
    %c0_38 = arith.constant 0 : index
    %69 = vector.load %arg11[%c0_37, %c0_38] : memref<32x16xf32, #tpu.memory_space<vmem>>, vector<32x16xf32>
    %cst_39 = arith.constant dense<0.000000e+00> : vector<32x256xf32>
    %70 = tpu.matmul %69, %3, %cst_39 {dimension_numbers = #tpu.dot_dimension_numbers<[1], [0], [0], [1], [0, 0, 1, 1], [], []>} : vector<32x16xf32>, vector<16x256xf32>, vector<32x256xf32> -> vector<32x256xf32>
    %c0_40 = arith.constant 0 : index
    %c0_41 = arith.constant 0 : index
    %71 = vector.load %arg12[%c0_40, %c0_41] : memref<32x1xf32, #tpu.memory_space<vmem>>, vector<32x1xf32>
    %72 = vector.broadcast %71 : vector<32x1xf32> to vector<32x256xf32>
    %73 = arith.addf %70, %72 : vector<32x256xf32>
    %74 = tpu.iota {dimensions = array<i32: 1>} : vector<1x128xi32>
    %c8_i32_42 = arith.constant 8 : i32
    %75 = vector.broadcast %c8_i32_42 : i32 to vector<1x128xi32>
    %76 = arith.cmpi slt, %74, %75 : vector<1x128xi32>
    %77 = vector.extract_strided_slice %68 {offsets = [0, 0], sizes = [32, 128], strides = [1, 1]} : vector<32x256xf32> to vector<32x128xf32>
    %cst_43 = arith.constant 0.000000e+00 : f32
    %78 = vector.shape_cast %76 : vector<1x128xi1> to vector<1x128xi1>
    %79 = vector.broadcast %78 : vector<1x128xi1> to vector<32x128xi1>
    %80 = vector.broadcast %cst_43 : f32 to vector<32x128xf32>
    %81 = arith.select %79, %77, %80 : vector<32x128xi1>, vector<32x128xf32>
    %cst_44 = arith.constant dense<0.000000e+00> : vector<32xf32>
    %82 = vector.multi_reduction <add>, %81, %cst_44 [1] : vector<32x128xf32> to vector<32xf32>
    %83 = vector.shape_cast %82 : vector<32xf32> to vector<32x1xf32>
    %84 = vector.extract_strided_slice %68 {offsets = [0, 128], sizes = [32, 128], strides = [1, 1]} : vector<32x256xf32> to vector<32x128xf32>
    %cst_45 = arith.constant 0.000000e+00 : f32
    %85 = vector.shape_cast %76 : vector<1x128xi1> to vector<1x128xi1>
    %86 = vector.broadcast %85 : vector<1x128xi1> to vector<32x128xi1>
    %87 = vector.broadcast %cst_45 : f32 to vector<32x128xf32>
    %88 = arith.select %86, %84, %87 : vector<32x128xi1>, vector<32x128xf32>
    %cst_46 = arith.constant dense<0.000000e+00> : vector<32xf32>
    %89 = vector.multi_reduction <add>, %88, %cst_46 [1] : vector<32x128xf32> to vector<32xf32>
    %90 = vector.shape_cast %89 : vector<32xf32> to vector<32x1xf32>
    %91 = tpu.concatenate %83, %90 in 1 : vector<32x1xf32>, vector<32x1xf32> -> vector<32x2xf32>
    %c0_47 = arith.constant 0 : index
    %c0_48 = arith.constant 0 : index
    %92 = vector.load %arg7[%c0_47, %c0_48] : memref<2x32xf32, #tpu.memory_space<vmem>>, vector<2x32xf32>
    %cst_49 = arith.constant dense<0.000000e+00> : vector<2x2xf32>
    %93 = tpu.matmul %92, %91, %cst_49 {dimension_numbers = #tpu.dot_dimension_numbers<[1], [0], [0], [1], [0, 0, 1, 1], [], []>} : vector<2x32xf32>, vector<32x2xf32>, vector<2x2xf32> -> vector<2x2xf32>
    %c0_50 = arith.constant 0 : index
    %c0_51 = arith.constant 0 : index
    %94 = vector.load %arg8[%c0_50, %c0_51] : memref<2x1xf32, #tpu.memory_space<vmem>>, vector<2x1xf32>
    %95 = vector.broadcast %94 : vector<2x1xf32> to vector<2x2xf32>
    %96 = arith.addf %93, %95 : vector<2x2xf32>
    %cst_52 = arith.constant 0.000000e+00 : f32
    %97 = vector.broadcast %cst_52 : f32 to vector<2x2xf32>
    %98 = arith.maximumf %96, %97 : vector<2x2xf32>
    %c0_53 = arith.constant 0 : index
    %c0_54 = arith.constant 0 : index
    %99 = vector.load %arg9[%c0_53, %c0_54] : memref<32x2xf32, #tpu.memory_space<vmem>>, vector<32x2xf32>
    %cst_55 = arith.constant dense<0.000000e+00> : vector<32x2xf32>
    %100 = tpu.matmul %99, %98, %cst_55 {dimension_numbers = #tpu.dot_dimension_numbers<[1], [0], [0], [1], [0, 0, 1, 1], [], []>} : vector<32x2xf32>, vector<2x2xf32>, vector<32x2xf32> -> vector<32x2xf32>
    %c0_56 = arith.constant 0 : index
    %c0_57 = arith.constant 0 : index
    %101 = vector.load %arg10[%c0_56, %c0_57] : memref<32x1xf32, #tpu.memory_space<vmem>>, vector<32x1xf32>
    %102 = vector.broadcast %101 : vector<32x1xf32> to vector<32x2xf32>
    %103 = arith.addf %100, %102 : vector<32x2xf32>
    %104 = arith.negf %103 : vector<32x2xf32>
    %105 = math.exp %104 : vector<32x2xf32>
    %cst_58 = arith.constant 1.000000e+00 : f32
    %106 = vector.broadcast %cst_58 : f32 to vector<32x2xf32>
    %107 = arith.addf %106, %105 : vector<32x2xf32>
    %108 = arith.divf %106, %107 : vector<32x2xf32>
    %109 = vector.extract_strided_slice %68 {offsets = [0, 0], sizes = [32, 128], strides = [1, 1]} : vector<32x256xf32> to vector<32x128xf32>
    %110 = vector.extract_strided_slice %73 {offsets = [0, 0], sizes = [32, 128], strides = [1, 1]} : vector<32x256xf32> to vector<32x128xf32>
    %111 = vector.extract_strided_slice %108 {offsets = [0, 0], sizes = [32, 1], strides = [1, 1]} : vector<32x2xf32> to vector<32x1xf32>
    %112 = vector.broadcast %111 : vector<32x1xf32> to vector<32x128xf32>
    %113 = arith.mulf %109, %112 : vector<32x128xf32>
    %114 = arith.addf %113, %110 : vector<32x128xf32>
    %cst_59 = arith.constant 0.000000e+00 : f32
    %115 = vector.broadcast %cst_59 : f32 to vector<32x128xf32>
    %116 = arith.maximumf %114, %115 : vector<32x128xf32>
    %c0_60 = arith.constant 0 : index
    %c0_61 = arith.constant 0 : index
    %c0_62 = arith.constant 0 : index
    %117 = vector.load %arg13[%c0_60, %c0_61, %c0_62] : memref<2x32x128xf32, #tpu.memory_space<vmem>>, vector<1x32x128xf32>
    %118 = vector.shape_cast %117 : vector<1x32x128xf32> to vector<32x128xf32>
    %119 = vector.shape_cast %116 : vector<32x128xf32> to vector<1x32x128xf32>
    tpu.vector_store %arg13[%c0_60, %c0_61, %c0_62], %119 {strides = array<i32>} : memref<2x32x128xf32, #tpu.memory_space<vmem>>, vector<1x32x128xf32>,
    %120 = vector.extract_strided_slice %68 {offsets = [0, 128], sizes = [32, 128], strides = [1, 1]} : vector<32x256xf32> to vector<32x128xf32>
    %121 = vector.extract_strided_slice %73 {offsets = [0, 128], sizes = [32, 128], strides = [1, 1]} : vector<32x256xf32> to vector<32x128xf32>
    %122 = vector.extract_strided_slice %108 {offsets = [0, 1], sizes = [32, 1], strides = [1, 1]} : vector<32x2xf32> to vector<32x1xf32>
    %123 = vector.broadcast %122 : vector<32x1xf32> to vector<32x128xf32>
    %124 = arith.mulf %120, %123 : vector<32x128xf32>
    %125 = arith.addf %124, %121 : vector<32x128xf32>
    %cst_63 = arith.constant 0.000000e+00 : f32
    %126 = vector.broadcast %cst_63 : f32 to vector<32x128xf32>
    %127 = arith.maximumf %125, %126 : vector<32x128xf32>
    %c1_64 = arith.constant 1 : index
    %c0_65 = arith.constant 0 : index
    %c0_66 = arith.constant 0 : index
    %128 = vector.load %arg13[%c1_64, %c0_65, %c0_66] : memref<2x32x128xf32, #tpu.memory_space<vmem>>, vector<1x32x128xf32>
    %129 = vector.shape_cast %128 : vector<1x32x128xf32> to vector<32x128xf32>
    %130 = vector.shape_cast %127 : vector<32x128xf32> to vector<1x32x128xf32>
    tpu.vector_store %arg13[%c1_64, %c0_65, %c0_66], %130 {strides = array<i32>} : memref<2x32x128xf32, #tpu.memory_space<vmem>>, vector<1x32x128xf32>,
    return
  }
  func.func @transform_0(%arg0: i32) -> (i32, i32, i32) {
    %c0_i32 = arith.constant 0 : i32
    %c0_i32_0 = arith.constant 0 : i32
    %c0_i32_1 = arith.constant 0 : i32
    return %c0_i32, %c0_i32_0, %arg0 : i32, i32, i32
  }
  func.func @transform_1(%arg0: i32) -> (i32, i32) {
    %c0_i32 = arith.constant 0 : i32
    %c0_i32_0 = arith.constant 0 : i32
    %c0_i32_1 = arith.constant 0 : i32
    return %c0_i32, %c0_i32_0 : i32, i32
  }
  func.func @transform_2(%arg0: i32) -> (i32, i32) {
    %c0_i32 = arith.constant 0 : i32
    %c0_i32_0 = arith.constant 0 : i32
    %c0_i32_1 = arith.constant 0 : i32
    return %c0_i32, %c0_i32_0 : i32, i32
  }
  func.func @transform_3(%arg0: i32) -> (i32, i32) {
    %c0_i32 = arith.constant 0 : i32
    %c0_i32_0 = arith.constant 0 : i32
    %c0_i32_1 = arith.constant 0 : i32
    return %c0_i32, %c0_i32_0 : i32, i32
  }
  func.func @transform_4(%arg0: i32) -> (i32, i32, i32) {
    %c0_i32 = arith.constant 0 : i32
    %c0_i32_0 = arith.constant 0 : i32
    %c0_i32_1 = arith.constant 0 : i32
    %c0_i32_2 = arith.constant 0 : i32
    return %c0_i32, %c0_i32_0, %c0_i32_1 : i32, i32, i32
  }
  func.func @transform_5(%arg0: i32) -> (i32, i32) {
    %c0_i32 = arith.constant 0 : i32
    %c0_i32_0 = arith.constant 0 : i32
    %c0_i32_1 = arith.constant 0 : i32
    return %c0_i32, %c0_i32_0 : i32, i32
  }
  func.func @transform_6(%arg0: i32) -> (i32, i32) {
    %c0_i32 = arith.constant 0 : i32
    %c0_i32_0 = arith.constant 0 : i32
    %c0_i32_1 = arith.constant 0 : i32
    return %c0_i32, %c0_i32_0 : i32, i32
  }
  func.func @transform_7(%arg0: i32) -> (i32, i32) {
    %c0_i32 = arith.constant 0 : i32
    %c0_i32_0 = arith.constant 0 : i32
    %c0_i32_1 = arith.constant 0 : i32
    return %c0_i32, %c0_i32_0 : i32, i32
  }
  func.func @transform_8(%arg0: i32) -> (i32, i32) {
    %c0_i32 = arith.constant 0 : i32
    %c0_i32_0 = arith.constant 0 : i32
    %c0_i32_1 = arith.constant 0 : i32
    return %c0_i32, %c0_i32_0 : i32, i32
  }
  func.func @transform_9(%arg0: i32) -> (i32, i32) {
    %c0_i32 = arith.constant 0 : i32
    %c0_i32_0 = arith.constant 0 : i32
    %c0_i32_1 = arith.constant 0 : i32
    return %c0_i32, %c0_i32_0 : i32, i32
  }
  func.func @transform_10(%arg0: i32) -> (i32, i32) {
    %c0_i32 = arith.constant 0 : i32
    %c0_i32_0 = arith.constant 0 : i32
    %c0_i32_1 = arith.constant 0 : i32
    return %c0_i32, %c0_i32_0 : i32, i32
  }
  func.func @transform_11(%arg0: i32) -> (i32, i32) {
    %c0_i32 = arith.constant 0 : i32
    %c0_i32_0 = arith.constant 0 : i32
    %c0_i32_1 = arith.constant 0 : i32
    return %c0_i32, %c0_i32_0 : i32, i32
  }
  func.func @transform_12(%arg0: i32) -> (i32, i32, i32) {
    %c0_i32 = arith.constant 0 : i32
    %c0_i32_0 = arith.constant 0 : i32
    %c0_i32_1 = arith.constant 0 : i32
    return %arg0, %c0_i32, %c0_i32_0 : i32, i32, i32
  }
}

module attributes {stable_mosaic.version = 11 : i64} {
  func.func @_basic_block_kernel(%arg0: i32, %arg1: memref<2x16x256xf32, #tpu.memory_space<vmem>>, %arg2: memref<1x256xi32, #tpu.memory_space<vmem>>, %arg3: memref<32x48xf32, #tpu.memory_space<vmem>>, %arg4: memref<32x1xf32, #tpu.memory_space<vmem>>, %arg5: memref<3x32x32xf32, #tpu.memory_space<vmem>>, %arg6: memref<32x1xf32, #tpu.memory_space<vmem>>, %arg7: memref<2x32xf32, #tpu.memory_space<vmem>>, %arg8: memref<2x1xf32, #tpu.memory_space<vmem>>, %arg9: memref<32x2xf32, #tpu.memory_space<vmem>>, %arg10: memref<32x1xf32, #tpu.memory_space<vmem>>, %arg11: memref<32x16xf32, #tpu.memory_space<vmem>>, %arg12: memref<32x1xf32, #tpu.memory_space<vmem>>, %arg13: memref<2x32x128xf32, #tpu.memory_space<vmem>>) attributes {dimension_semantics = [#tpu.dimension_semantics<parallel>], iteration_bounds = array<i64: 1>, scalar_prefetch = 0 : i64, scratch_operands = 0 : i64, tpu.core_type = #tpu.core_type<tc>, window_params = [{transform_indices = @transform_0, window_bounds = array<i64: 2, 16, 256>}, {pipeline_mode = #tpu.pipeline_mode<synchronous>, transform_indices = @transform_1, window_bounds = array<i64: 1, 256>}, {pipeline_mode = #tpu.pipeline_mode<synchronous>, transform_indices = @transform_2, window_bounds = array<i64: 32, 48>}, {pipeline_mode = #tpu.pipeline_mode<synchronous>, transform_indices = @transform_3, window_bounds = array<i64: 32, 1>}, {pipeline_mode = #tpu.pipeline_mode<synchronous>, transform_indices = @transform_4, window_bounds = array<i64: 3, 32, 32>}, {pipeline_mode = #tpu.pipeline_mode<synchronous>, transform_indices = @transform_5, window_bounds = array<i64: 32, 1>}, {pipeline_mode = #tpu.pipeline_mode<synchronous>, transform_indices = @transform_6, window_bounds = array<i64: 2, 32>}, {pipeline_mode = #tpu.pipeline_mode<synchronous>, transform_indices = @transform_7, window_bounds = array<i64: 2, 1>}, {pipeline_mode = #tpu.pipeline_mode<synchronous>, transform_indices = @transform_8, window_bounds = array<i64: 32, 2>}, {pipeline_mode = #tpu.pipeline_mode<synchronous>, transform_indices = @transform_9, window_bounds = array<i64: 32, 1>}, {pipeline_mode = #tpu.pipeline_mode<synchronous>, transform_indices = @transform_10, window_bounds = array<i64: 32, 16>}, {pipeline_mode = #tpu.pipeline_mode<synchronous>, transform_indices = @transform_11, window_bounds = array<i64: 32, 1>}, {transform_indices = @transform_12, window_bounds = array<i64: 2, 32, 128>}]} {
    %c0 = arith.constant 0 : index
    %c0_0 = arith.constant 0 : index
    %c0_1 = arith.constant 0 : index
    %0 = vector.load %arg1[%c0, %c0_0, %c0_1] : memref<2x16x256xf32, #tpu.memory_space<vmem>>, vector<1x16x256xf32>
    %1 = vector.shape_cast %0 : vector<1x16x256xf32> to vector<16x256xf32>
    %c1 = arith.constant 1 : index
    %c0_2 = arith.constant 0 : index
    %c0_3 = arith.constant 0 : index
    %2 = vector.load %arg1[%c1, %c0_2, %c0_3] : memref<2x16x256xf32, #tpu.memory_space<vmem>>, vector<1x16x256xf32>
    %3 = vector.shape_cast %2 : vector<1x16x256xf32> to vector<16x256xf32>
    %c255_i32 = arith.constant 255 : i32
    %4 = tpu.dynamic_rotate %1 by %c255_i32 dim 1 : vector<16x256xf32>, i32 -> vector<16x256xf32>
    %5 = tpu.concatenate %1, %3, %4 in 0 : vector<16x256xf32>, vector<16x256xf32>, vector<16x256xf32> -> vector<48x256xf32>
    %c0_4 = arith.constant 0 : index
    %c0_5 = arith.constant 0 : index
    %6 = vector.load %arg3[%c0_4, %c0_5] : memref<32x48xf32, #tpu.memory_space<vmem>>, vector<32x48xf32>
    %cst = arith.constant dense<0.000000e+00> : vector<32x256xf32>
    %7 = tpu.matmul %6, %5, %cst {dimension_numbers = #tpu.dot_dimension_numbers<[1], [0], [0], [1], [0, 0, 1, 1], [], []>} : vector<32x48xf32>, vector<48x256xf32>, vector<32x256xf32> -> vector<32x256xf32>
    %c0_6 = arith.constant 0 : index
    %c0_7 = arith.constant 0 : index
    %8 = vector.load %arg4[%c0_6, %c0_7] : memref<32x1xf32, #tpu.memory_space<vmem>>, vector<32x1xf32>
    %9 = vector.broadcast %8 : vector<32x1xf32> to vector<32x256xf32>
    %10 = arith.addf %7, %9 : vector<32x256xf32>
    %cst_8 = arith.constant 0.000000e+00 : f32
    %11 = vector.broadcast %cst_8 : f32 to vector<32x256xf32>
    %12 = arith.maximumf %10, %11 : vector<32x256xf32>
    %c0_9 = arith.constant 0 : index
    %c0_10 = arith.constant 0 : index
    %13 = vector.load %arg2[%c0_9, %c0_10] : memref<1x256xi32, #tpu.memory_space<vmem>>, vector<1x256xi32>
    %c-1_i32 = arith.constant -1 : i32
    %14 = vector.broadcast %c-1_i32 : i32 to vector<1x256xi32>
    %15 = arith.addi %13, %14 : vector<1x256xi32>
    %c0_i32 = arith.constant 0 : i32
    %16 = vector.broadcast %c0_i32 : i32 to vector<1x256xi32>
    %17 = arith.cmpi sge, %15, %16 : vector<1x256xi32>
    %c-1_i32_11 = arith.constant -1 : i32
    %18 = vector.broadcast %c-1_i32_11 : i32 to vector<1x256xi32>
    %19 = arith.addi %13, %18 : vector<1x256xi32>
    %c8_i32 = arith.constant 8 : i32
    %20 = vector.broadcast %c8_i32 : i32 to vector<1x256xi32>
    %21 = arith.cmpi slt, %19, %20 : vector<1x256xi32>
    %22 = arith.andi %17, %21 : vector<1x256xi1>
    %c1_i32 = arith.constant 1 : i32
    %23 = tpu.dynamic_rotate %12 by %c1_i32 dim 1 : vector<32x256xf32>, i32 -> vector<32x256xf32>
    %cst_12 = arith.constant 0.000000e+00 : f32
    %24 = vector.shape_cast %22 : vector<1x256xi1> to vector<1x256xi1>
    %25 = vector.broadcast %24 : vector<1x256xi1> to vector<32x256xi1>
    %26 = vector.broadcast %cst_12 : f32 to vector<32x256xf32>
    %27 = arith.select %25, %23, %26 : vector<32x256xi1>, vector<32x256xf32>
    %c0_13 = arith.constant 0 : index
    %c0_14 = arith.constant 0 : index
    %c0_15 = arith.constant 0 : index
    %28 = vector.load %arg5[%c0_13, %c0_14, %c0_15] : memref<3x32x32xf32, #tpu.memory_space<vmem>>, vector<1x32x32xf32>
    %29 = vector.shape_cast %28 : vector<1x32x32xf32> to vector<32x32xf32>
    %cst_16 = arith.constant dense<0.000000e+00> : vector<32x256xf32>
    %30 = tpu.matmul %29, %27, %cst_16 {dimension_numbers = #tpu.dot_dimension_numbers<[1], [0], [0], [1], [0, 0, 1, 1], [], []>} : vector<32x32xf32>, vector<32x256xf32>, vector<32x256xf32> -> vector<32x256xf32>
    %c0_i32_17 = arith.constant 0 : i32
    %31 = vector.broadcast %c0_i32_17 : i32 to vector<1x256xi32>
    %32 = arith.addi %13, %31 : vector<1x256xi32>
    %c0_i32_18 = arith.constant 0 : i32
    %33 = vector.broadcast %c0_i32_18 : i32 to vector<1x256xi32>
    %34 = arith.cmpi sge, %32, %33 : vector<1x256xi32>
    %c0_i32_19 = arith.constant 0 : i32
    %35 = vector.broadcast %c0_i32_19 : i32 to vector<1x256xi32>
    %36 = arith.addi %13, %35 : vector<1x256xi32>
    %c8_i32_20 = arith.constant 8 : i32
    %37 = vector.broadcast %c8_i32_20 : i32 to vector<1x256xi32>
    %38 = arith.cmpi slt, %36, %37 : vector<1x256xi32>
    %39 = arith.andi %34, %38 : vector<1x256xi1>
    %cst_21 = arith.constant 0.000000e+00 : f32
    %40 = vector.shape_cast %39 : vector<1x256xi1> to vector<1x256xi1>
    %41 = vector.broadcast %40 : vector<1x256xi1> to vector<32x256xi1>
    %42 = vector.broadcast %cst_21 : f32 to vector<32x256xf32>
    %43 = arith.select %41, %12, %42 : vector<32x256xi1>, vector<32x256xf32>
    %c1_22 = arith.constant 1 : index
    %c0_23 = arith.constant 0 : index
    %c0_24 = arith.constant 0 : index
    %44 = vector.load %arg5[%c1_22, %c0_23, %c0_24] : memref<3x32x32xf32, #tpu.memory_space<vmem>>, vector<1x32x32xf32>
    %45 = vector.shape_cast %44 : vector<1x32x32xf32> to vector<32x32xf32>
    %cst_25 = arith.constant dense<0.000000e+00> : vector<32x256xf32>
    %46 = tpu.matmul %45, %43, %cst_25 {dimension_numbers = #tpu.dot_dimension_numbers<[1], [0], [0], [1], [0, 0, 1, 1], [], []>} : vector<32x32xf32>, vector<32x256xf32>, vector<32x256xf32> -> vector<32x256xf32>
    %47 = arith.addf %30, %46 : vector<32x256xf32>
    %c1_i32_26 = arith.constant 1 : i32
    %48 = vector.broadcast %c1_i32_26 : i32 to vector<1x256xi32>
    %49 = arith.addi %13, %48 : vector<1x256xi32>
    %c0_i32_27 = arith.constant 0 : i32
    %50 = vector.broadcast %c0_i32_27 : i32 to vector<1x256xi32>
    %51 = arith.cmpi sge, %49, %50 : vector<1x256xi32>
    %c1_i32_28 = arith.constant 1 : i32
    %52 = vector.broadcast %c1_i32_28 : i32 to vector<1x256xi32>
    %53 = arith.addi %13, %52 : vector<1x256xi32>
    %c8_i32_29 = arith.constant 8 : i32
    %54 = vector.broadcast %c8_i32_29 : i32 to vector<1x256xi32>
    %55 = arith.cmpi slt, %53, %54 : vector<1x256xi32>
    %56 = arith.andi %51, %55 : vector<1x256xi1>
    %c255_i32_30 = arith.constant 255 : i32
    %57 = tpu.dynamic_rotate %12 by %c255_i32_30 dim 1 : vector<32x256xf32>, i32 -> vector<32x256xf32>
    %cst_31 = arith.constant 0.000000e+00 : f32
    %58 = vector.shape_cast %56 : vector<1x256xi1> to vector<1x256xi1>
    %59 = vector.broadcast %58 : vector<1x256xi1> to vector<32x256xi1>
    %60 = vector.broadcast %cst_31 : f32 to vector<32x256xf32>
    %61 = arith.select %59, %57, %60 : vector<32x256xi1>, vector<32x256xf32>
    %c2 = arith.constant 2 : index
    %c0_32 = arith.constant 0 : index
    %c0_33 = arith.constant 0 : index
    %62 = vector.load %arg5[%c2, %c0_32, %c0_33] : memref<3x32x32xf32, #tpu.memory_space<vmem>>, vector<1x32x32xf32>
    %63 = vector.shape_cast %62 : vector<1x32x32xf32> to vector<32x32xf32>
    %cst_34 = arith.constant dense<0.000000e+00> : vector<32x256xf32>
    %64 = tpu.matmul %63, %61, %cst_34 {dimension_numbers = #tpu.dot_dimension_numbers<[1], [0], [0], [1], [0, 0, 1, 1], [], []>} : vector<32x32xf32>, vector<32x256xf32>, vector<32x256xf32> -> vector<32x256xf32>
    %65 = arith.addf %47, %64 : vector<32x256xf32>
    %c0_35 = arith.constant 0 : index
    %c0_36 = arith.constant 0 : index
    %66 = vector.load %arg6[%c0_35, %c0_36] : memref<32x1xf32, #tpu.memory_space<vmem>>, vector<32x1xf32>
    %67 = vector.broadcast %66 : vector<32x1xf32> to vector<32x256xf32>
    %68 = arith.addf %65, %67 : vector<32x256xf32>
    %c0_37 = arith.constant 0 : index
    %c0_38 = arith.constant 0 : index
    %69 = vector.load %arg11[%c0_37, %c0_38] : memref<32x16xf32, #tpu.memory_space<vmem>>, vector<32x16xf32>
    %cst_39 = arith.constant dense<0.000000e+00> : vector<32x256xf32>
    %70 = tpu.matmul %69, %3, %cst_39 {dimension_numbers = #tpu.dot_dimension_numbers<[1], [0], [0], [1], [0, 0, 1, 1], [], []>} : vector<32x16xf32>, vector<16x256xf32>, vector<32x256xf32> -> vector<32x256xf32>
    %c0_40 = arith.constant 0 : index
    %c0_41 = arith.constant 0 : index
    %71 = vector.load %arg12[%c0_40, %c0_41] : memref<32x1xf32, #tpu.memory_space<vmem>>, vector<32x1xf32>
    %72 = vector.broadcast %71 : vector<32x1xf32> to vector<32x256xf32>
    %73 = arith.addf %70, %72 : vector<32x256xf32>
    %74 = tpu.iota {dimensions = array<i32: 1>} : vector<1x128xi32>
    %c8_i32_42 = arith.constant 8 : i32
    %75 = vector.broadcast %c8_i32_42 : i32 to vector<1x128xi32>
    %76 = arith.cmpi slt, %74, %75 : vector<1x128xi32>
    %77 = vector.extract_strided_slice %68 {offsets = [0, 0], sizes = [32, 128], strides = [1, 1]} : vector<32x256xf32> to vector<32x128xf32>
    %cst_43 = arith.constant 0.000000e+00 : f32
    %78 = vector.shape_cast %76 : vector<1x128xi1> to vector<1x128xi1>
    %79 = vector.broadcast %78 : vector<1x128xi1> to vector<32x128xi1>
    %80 = vector.broadcast %cst_43 : f32 to vector<32x128xf32>
    %81 = arith.select %79, %77, %80 : vector<32x128xi1>, vector<32x128xf32>
    %cst_44 = arith.constant dense<0.000000e+00> : vector<32xf32>
    %82 = vector.multi_reduction <add>, %81, %cst_44 [1] : vector<32x128xf32> to vector<32xf32>
    %83 = vector.shape_cast %82 : vector<32xf32> to vector<32x1xf32>
    %84 = vector.extract_strided_slice %68 {offsets = [0, 128], sizes = [32, 128], strides = [1, 1]} : vector<32x256xf32> to vector<32x128xf32>
    %cst_45 = arith.constant 0.000000e+00 : f32
    %85 = vector.shape_cast %76 : vector<1x128xi1> to vector<1x128xi1>
    %86 = vector.broadcast %85 : vector<1x128xi1> to vector<32x128xi1>
    %87 = vector.broadcast %cst_45 : f32 to vector<32x128xf32>
    %88 = arith.select %86, %84, %87 : vector<32x128xi1>, vector<32x128xf32>
    %cst_46 = arith.constant dense<0.000000e+00> : vector<32xf32>
    %89 = vector.multi_reduction <add>, %88, %cst_46 [1] : vector<32x128xf32> to vector<32xf32>
    %90 = vector.shape_cast %89 : vector<32xf32> to vector<32x1xf32>
    %91 = tpu.concatenate %83, %90 in 1 : vector<32x1xf32>, vector<32x1xf32> -> vector<32x2xf32>
    %c0_47 = arith.constant 0 : index
    %c0_48 = arith.constant 0 : index
    %92 = vector.load %arg7[%c0_47, %c0_48] : memref<2x32xf32, #tpu.memory_space<vmem>>, vector<2x32xf32>
    %cst_49 = arith.constant dense<0.000000e+00> : vector<2x2xf32>
    %93 = tpu.matmul %92, %91, %cst_49 {dimension_numbers = #tpu.dot_dimension_numbers<[1], [0], [0], [1], [0, 0, 1, 1], [], []>} : vector<2x32xf32>, vector<32x2xf32>, vector<2x2xf32> -> vector<2x2xf32>
    %c0_50 = arith.constant 0 : index
    %c0_51 = arith.constant 0 : index
    %94 = vector.load %arg8[%c0_50, %c0_51] : memref<2x1xf32, #tpu.memory_space<vmem>>, vector<2x1xf32>
    %95 = vector.broadcast %94 : vector<2x1xf32> to vector<2x2xf32>
    %96 = arith.addf %93, %95 : vector<2x2xf32>
    %cst_52 = arith.constant 0.000000e+00 : f32
    %97 = vector.broadcast %cst_52 : f32 to vector<2x2xf32>
    %98 = arith.maximumf %96, %97 : vector<2x2xf32>
    %c0_53 = arith.constant 0 : index
    %c0_54 = arith.constant 0 : index
    %99 = vector.load %arg9[%c0_53, %c0_54] : memref<32x2xf32, #tpu.memory_space<vmem>>, vector<32x2xf32>
    %cst_55 = arith.constant dense<0.000000e+00> : vector<32x2xf32>
    %100 = tpu.matmul %99, %98, %cst_55 {dimension_numbers = #tpu.dot_dimension_numbers<[1], [0], [0], [1], [0, 0, 1, 1], [], []>} : vector<32x2xf32>, vector<2x2xf32>, vector<32x2xf32> -> vector<32x2xf32>
    %c0_56 = arith.constant 0 : index
    %c0_57 = arith.constant 0 : index
    %101 = vector.load %arg10[%c0_56, %c0_57] : memref<32x1xf32, #tpu.memory_space<vmem>>, vector<32x1xf32>
    %102 = vector.broadcast %101 : vector<32x1xf32> to vector<32x2xf32>
    %103 = arith.addf %100, %102 : vector<32x2xf32>
    %104 = arith.negf %103 : vector<32x2xf32>
    %105 = math.exp %104 : vector<32x2xf32>
    %cst_58 = arith.constant 1.000000e+00 : f32
    %106 = vector.broadcast %cst_58 : f32 to vector<32x2xf32>
    %107 = arith.addf %106, %105 : vector<32x2xf32>
    %108 = arith.divf %106, %107 : vector<32x2xf32>
    %109 = vector.extract_strided_slice %68 {offsets = [0, 0], sizes = [32, 128], strides = [1, 1]} : vector<32x256xf32> to vector<32x128xf32>
    %110 = vector.extract_strided_slice %73 {offsets = [0, 0], sizes = [32, 128], strides = [1, 1]} : vector<32x256xf32> to vector<32x128xf32>
    %111 = vector.extract_strided_slice %108 {offsets = [0, 0], sizes = [32, 1], strides = [1, 1]} : vector<32x2xf32> to vector<32x1xf32>
    %112 = vector.broadcast %111 : vector<32x1xf32> to vector<32x128xf32>
    %113 = arith.mulf %109, %112 : vector<32x128xf32>
    %114 = arith.addf %113, %110 : vector<32x128xf32>
    %cst_59 = arith.constant 0.000000e+00 : f32
    %115 = vector.broadcast %cst_59 : f32 to vector<32x128xf32>
    %116 = arith.maximumf %114, %115 : vector<32x128xf32>
    %c0_60 = arith.constant 0 : index
    %c0_61 = arith.constant 0 : index
    %c0_62 = arith.constant 0 : index
    %117 = vector.load %arg13[%c0_60, %c0_61, %c0_62] : memref<2x32x128xf32, #tpu.memory_space<vmem>>, vector<1x32x128xf32>
    %118 = vector.shape_cast %117 : vector<1x32x128xf32> to vector<32x128xf32>
    %119 = vector.shape_cast %116 : vector<32x128xf32> to vector<1x32x128xf32>
    tpu.vector_store %arg13[%c0_60, %c0_61, %c0_62], %119 {strides = array<i32>} : memref<2x32x128xf32, #tpu.memory_space<vmem>>, vector<1x32x128xf32>,
    %120 = vector.extract_strided_slice %68 {offsets = [0, 128], sizes = [32, 128], strides = [1, 1]} : vector<32x256xf32> to vector<32x128xf32>
    %121 = vector.extract_strided_slice %73 {offsets = [0, 128], sizes = [32, 128], strides = [1, 1]} : vector<32x256xf32> to vector<32x128xf32>
    %122 = vector.extract_strided_slice %108 {offsets = [0, 1], sizes = [32, 1], strides = [1, 1]} : vector<32x2xf32> to vector<32x1xf32>
    %123 = vector.broadcast %122 : vector<32x1xf32> to vector<32x128xf32>
    %124 = arith.mulf %120, %123 : vector<32x128xf32>
    %125 = arith.addf %124, %121 : vector<32x128xf32>
    %cst_63 = arith.constant 0.000000e+00 : f32
    %126 = vector.broadcast %cst_63 : f32 to vector<32x128xf32>
    %127 = arith.maximumf %125, %126 : vector<32x128xf32>
    %c1_64 = arith.constant 1 : index
    %c0_65 = arith.constant 0 : index
    %c0_66 = arith.constant 0 : index
    %128 = vector.load %arg13[%c1_64, %c0_65, %c0_66] : memref<2x32x128xf32, #tpu.memory_space<vmem>>, vector<1x32x128xf32>
    %129 = vector.shape_cast %128 : vector<1x32x128xf32> to vector<32x128xf32>
    %130 = vector.shape_cast %127 : vector<32x128xf32> to vector<1x32x128xf32>
    tpu.vector_store %arg13[%c1_64, %c0_65, %c0_66], %130 {strides = array<i32>} : memref<2x32x128xf32, #tpu.memory_space<vmem>>, vector<1x32x128xf32>,
    return
  }
  func.func @transform_0(%arg0: i32) -> (i32, i32, i32) {
    %c0_i32 = arith.constant 0 : i32
    %c0_i32_0 = arith.constant 0 : i32
    %c0_i32_1 = arith.constant 0 : i32
    return %c0_i32, %c0_i32_0, %arg0 : i32, i32, i32
  }
  func.func @transform_1(%arg0: i32) -> (i32, i32) {
    %c0_i32 = arith.constant 0 : i32
    %c0_i32_0 = arith.constant 0 : i32
    %c0_i32_1 = arith.constant 0 : i32
    return %c0_i32, %c0_i32_0 : i32, i32
  }
  func.func @transform_2(%arg0: i32) -> (i32, i32) {
    %c0_i32 = arith.constant 0 : i32
    %c0_i32_0 = arith.constant 0 : i32
    %c0_i32_1 = arith.constant 0 : i32
    return %c0_i32, %c0_i32_0 : i32, i32
  }
  func.func @transform_3(%arg0: i32) -> (i32, i32) {
    %c0_i32 = arith.constant 0 : i32
    %c0_i32_0 = arith.constant 0 : i32
    %c0_i32_1 = arith.constant 0 : i32
    return %c0_i32, %c0_i32_0 : i32, i32
  }
  func.func @transform_4(%arg0: i32) -> (i32, i32, i32) {
    %c0_i32 = arith.constant 0 : i32
    %c0_i32_0 = arith.constant 0 : i32
    %c0_i32_1 = arith.constant 0 : i32
    %c0_i32_2 = arith.constant 0 : i32
    return %c0_i32, %c0_i32_0, %c0_i32_1 : i32, i32, i32
  }
  func.func @transform_5(%arg0: i32) -> (i32, i32) {
    %c0_i32 = arith.constant 0 : i32
    %c0_i32_0 = arith.constant 0 : i32
    %c0_i32_1 = arith.constant 0 : i32
    return %c0_i32, %c0_i32_0 : i32, i32
  }
  func.func @transform_6(%arg0: i32) -> (i32, i32) {
    %c0_i32 = arith.constant 0 : i32
    %c0_i32_0 = arith.constant 0 : i32
    %c0_i32_1 = arith.constant 0 : i32
    return %c0_i32, %c0_i32_0 : i32, i32
  }
  func.func @transform_7(%arg0: i32) -> (i32, i32) {
    %c0_i32 = arith.constant 0 : i32
    %c0_i32_0 = arith.constant 0 : i32
    %c0_i32_1 = arith.constant 0 : i32
    return %c0_i32, %c0_i32_0 : i32, i32
  }
  func.func @transform_8(%arg0: i32) -> (i32, i32) {
    %c0_i32 = arith.constant 0 : i32
    %c0_i32_0 = arith.constant 0 : i32
    %c0_i32_1 = arith.constant 0 : i32
    return %c0_i32, %c0_i32_0 : i32, i32
  }
  func.func @transform_9(%arg0: i32) -> (i32, i32) {
    %c0_i32 = arith.constant 0 : i32
    %c0_i32_0 = arith.constant 0 : i32
    %c0_i32_1 = arith.constant 0 : i32
    return %c0_i32, %c0_i32_0 : i32, i32
  }
  func.func @transform_10(%arg0: i32) -> (i32, i32) {
    %c0_i32 = arith.constant 0 : i32
    %c0_i32_0 = arith.constant 0 : i32
    %c0_i32_1 = arith.constant 0 : i32
    return %c0_i32, %c0_i32_0 : i32, i32
  }
  func.func @transform_11(%arg0: i32) -> (i32, i32) {
    %c0_i32 = arith.constant 0 : i32
    %c0_i32_0 = arith.constant 0 : i32
    %c0_i32_1 = arith.constant 0 : i32
    return %c0_i32, %c0_i32_0 : i32, i32
  }
  func.func @transform_12(%arg0: i32) -> (i32, i32, i32) {
    %c0_i32 = arith.constant 0 : i32
    %c0_i32_0 = arith.constant 0 : i32
    %c0_i32_1 = arith.constant 0 : i32
    return %arg0, %c0_i32, %c0_i32_0 : i32, i32, i32
  }
}

</mosaic_0001>

<llo_original>
// kernel: tpu_custom_call.1
$region0: #{tpu_custom_call.1}
  #allocation0 [shape = 'u32[]', space=smem, size = 0x4, offset = 0x4, fixed_abs, tag = 'smem constant byte address 0x4 - core index']
  #allocation1 [shape = 'u32[144,128]{1,0:T(1,128)}', space=vmem, size = 0x12000, scoped, tag = 'internal scratch']
  %s0 = inlined_call_operand.vmem [shape: f32[2,16,256], index: 0, kind: input, shape index: {}]
  %s1 = inlined_call_operand.vmem [shape: s32[1,256], index: 1, kind: input, shape index: {}]
  %s2 = inlined_call_operand.vmem [shape: f32[32,48], index: 2, kind: input, shape index: {}]
  %s3 = inlined_call_operand.vmem [shape: f32[32,1], index: 3, kind: input, shape index: {}]
  %s4 = inlined_call_operand.vmem [shape: f32[3,32,32], index: 4, kind: input, shape index: {}]
  %s5 = inlined_call_operand.vmem [shape: f32[32,1], index: 5, kind: input, shape index: {}]
  %s6 = inlined_call_operand.vmem [shape: f32[2,32], index: 6, kind: input, shape index: {}]
  %s7 = inlined_call_operand.vmem [shape: f32[2,1], index: 7, kind: input, shape index: {}]
  %s8 = inlined_call_operand.vmem [shape: f32[32,2], index: 8, kind: input, shape index: {}]
  %s9 = inlined_call_operand.vmem [shape: f32[32,1], index: 9, kind: input, shape index: {}]
  %s10 = inlined_call_operand.vmem [shape: f32[32,16], index: 10, kind: input, shape index: {}]
  %s11 = inlined_call_operand.vmem [shape: f32[32,1], index: 11, kind: input, shape index: {}]
  %s12 = inlined_call_operand.hbm [shape: f32[2,32,128], index: 12, kind: output, shape index: {}]
  %s13 = sld [smem:[#allocation0]]
  $region58: #{tpu_custom_call.1} parent=0
    _
  %s15 = ssub.s32 1, %s13
  %s16 = scalar_select 0, %s15, %s13
  $region1: #{tpu_custom_call.1} parent=0
    #allocation2 [shape = 'u8[32768]{0}', space=vmem, size = 0x8000, scoped, tag = 'output window, operand 0, single buffered']
    #allocation3 [shape = 's32[1]{0}', space=sflag, size = 0x4, scoped, tag = 'scoped memory for tpu_custom_call.1']
    %17 = vsyncpa [#allocation3], 0
    // Predicated region
    $region2: #{tpu_custom_call.1} parent=1 // pred_check
      _
    $region3: #{tpu_custom_call.1} parent=1 // pred_check_branch
      %19 = sbr.rel (0) target = $region5
    $region4: #{tpu_custom_call.1} parent=1 // pred_region
      _
    $region5: #{tpu_custom_call.1} parent=1 // pred_fallthru
      _
    // Predicated region
    $region6: #{tpu_custom_call.1} parent=1 // pred_check
      _
    $region7: #{tpu_custom_call.1} parent=1 // pred_check_branch
      %21 = sbr.rel (0) target = $region9
    $region8: #{tpu_custom_call.1} parent=1 // pred_region
      _
    $region9: #{tpu_custom_call.1} parent=1 // pred_fallthru
      _
    // Predicated region
    $region10: #{tpu_custom_call.1} parent=1 // pred_check
      _
    $region11: #{tpu_custom_call.1} parent=1 // pred_check_branch
      %23 = sbr.rel (0) target = $region13
    $region12: #{tpu_custom_call.1} parent=1 // pred_region
      _
    $region13: #{tpu_custom_call.1} parent=1 // pred_fallthru
      _
    // Predicated region
    $region14: #{tpu_custom_call.1} parent=1 // pred_check
      _
    $region15: #{tpu_custom_call.1} parent=1 // pred_check_branch
      %25 = sbr.rel (0) target = $region17
    $region16: #{tpu_custom_call.1} parent=1 // pred_region
      _
    $region17: #{tpu_custom_call.1} parent=1 // pred_fallthru
      _
    // Predicated region
    $region18: #{tpu_custom_call.1} parent=1 // pred_check
      _
    $region19: #{tpu_custom_call.1} parent=1 // pred_check_branch
      %27 = sbr.rel (0) target = $region21
    $region20: #{tpu_custom_call.1} parent=1 // pred_region
      _
    $region21: #{tpu_custom_call.1} parent=1 // pred_fallthru
      _
    // Predicated region
    $region22: #{tpu_custom_call.1} parent=1 // pred_check
      _
    $region23: #{tpu_custom_call.1} parent=1 // pred_check_branch
      %29 = sbr.rel (0) target = $region25
    $region24: #{tpu_custom_call.1} parent=1 // pred_region
      _
    $region25: #{tpu_custom_call.1} parent=1 // pred_fallthru
      _
    // Predicated region
    $region26: #{tpu_custom_call.1} parent=1 // pred_check
      _
    $region27: #{tpu_custom_call.1} parent=1 // pred_check_branch
      %31 = sbr.rel (0) target = $region29
    $region28: #{tpu_custom_call.1} parent=1 // pred_region
      _
    $region29: #{tpu_custom_call.1} parent=1 // pred_fallthru
      _
    // Predicated region
    $region30: #{tpu_custom_call.1} parent=1 // pred_check
      _
    $region31: #{tpu_custom_call.1} parent=1 // pred_check_branch
      %33 = sbr.rel (0) target = $region33
    $region32: #{tpu_custom_call.1} parent=1 // pred_region
      _
    $region33: #{tpu_custom_call.1} parent=1 // pred_fallthru
      _
    // Predicated region
    $region34: #{tpu_custom_call.1} parent=1 // pred_check
      _
    $region35: #{tpu_custom_call.1} parent=1 // pred_check_branch
      %35 = sbr.rel (0) target = $region37
    $region36: #{tpu_custom_call.1} parent=1 // pred_region
      _
    $region37: #{tpu_custom_call.1} parent=1 // pred_fallthru
      _
    // Predicated region
    $region38: #{tpu_custom_call.1} parent=1 // pred_check
      _
    $region39: #{tpu_custom_call.1} parent=1 // pred_check_branch
      %37 = sbr.rel (0) target = $region41
    $region40: #{tpu_custom_call.1} parent=1 // pred_region
      _
    $region41: #{tpu_custom_call.1} parent=1 // pred_fallthru
      _
    // Predicated region
    $region42: #{tpu_custom_call.1} parent=1 // pred_check
      _
    $region43: #{tpu_custom_call.1} parent=1 // pred_check_branch
      %39 = sbr.rel (0) target = $region45
    $region44: #{tpu_custom_call.1} parent=1 // pred_region
      _
    $region45: #{tpu_custom_call.1} parent=1 // pred_fallthru
      _
    // Predicated region
    $region46: #{tpu_custom_call.1} parent=1 // pred_check
      _
    $region47: #{tpu_custom_call.1} parent=1 // pred_check_branch
      %41 = sbr.rel (0) target = $region49
    $region48: #{tpu_custom_call.1} parent=1 // pred_region
      _
    $region49: #{tpu_custom_call.1} parent=1 // pred_fallthru
      _
    %v42 = vld [vmem:[%s0] sm:$0xff]
    %v43 = vld [vmem:[%s0 + $0x8] sm:$0xff]
    %v44 = vld [vmem:[%s0 + $0x10] sm:$0xff]
    %v45 = vld [vmem:[%s0 + $0x18] sm:$0xff]
    %s46 = scalar_lea.vmem %s0, 32
    %v47 = vld [vmem:[%s46] sm:$0xff]
    %v48 = vld [vmem:[%s46 + $0x8] sm:$0xff]
    %v49 = vld [vmem:[%s46 + $0x10] sm:$0xff]
    %v50 = vld [vmem:[%s46 + $0x18] sm:$0xff]
    %51 = vrot.lane.b32.xlu0 %v42, 127
    %v52 = vpop.permute.xlu0 %51
    %53 = vrot.lane.b32.xlu0 %v44, 127
    %v54 = vpop.permute.xlu0 %53
    %55 = vrot.lane.b32.xlu0 %v43, 127
    %v56 = vpop.permute.xlu0 %55
    %57 = vrot.lane.b32.xlu0 %v45, 127
    %v58 = vpop.permute.xlu0 %57
    %v59 = vlaneseq
    %v60 = vand.u32 %v59, 127
    %vm61 = vcmp.lt.s32.totalorder %v60, 127
    %v62 = vsel %vm61, %v52, %v56
    %v63 = vsel %vm61, %v54, %v58
    %v64 = vsel %vm61, %v56, %v52
    %v65 = vsel %vm61, %v58, %v54
    %v66 = vld [vmem:[%s2] sm:$0xff]
    %v67 = vld [vmem:[%s2 + $0x8] sm:$0xff]
    %v68 = vld [vmem:[%s2 + $0x10] sm:$0xff]
    %v69 = vld [vmem:[%s2 + $0x18] sm:$0xff]
    %v70 = vld [vmem:[%s3] sm:$0xff]
    %v71 = vld [vmem:[%s3 + $0x8] sm:$0xff]
    %v72 = vld [vmem:[%s3 + $0x10] sm:$0xff]
    %v73 = vld [vmem:[%s3 + $0x18] sm:$0xff]
    %75 = vset.pattern.permute.xlu0 0
    %76 = vperm.xlu0 %75, %v70
    %v77 = vpop.permute.xlu0 %76
    %80 = vset.pattern.permute.xlu0 0
    %81 = vperm.xlu0 %80, %v71
    %v82 = vpop.permute.xlu0 %81
    %85 = vset.pattern.permute.xlu0 0
    %86 = vperm.xlu0 %85, %v72
    %v87 = vpop.permute.xlu0 %86
    %90 = vset.pattern.permute.xlu0 0
    %91 = vperm.xlu0 %90, %v73
    %v92 = vpop.permute.xlu0 %91
    %vm94 = vcmask 392192
    %v96 = vsel %vm94, %v66, 0
    %v99 = vsel %vm94, %v67, 0
    %v102 = vsel %vm94, %v68, 0
    %v105 = vsel %vm94, %v69, 0
    %107 = vmatprep.subr.mxu0 %v43
    %108 = vmatpush1.msra.mxu0 %v42
    %109 = vmatprep.subr.mxu0 %v45
    %110 = vmatpush1.msra.mxu0 %v44
    %111 = vmatprep.subr.mxu0 %v48
    %112 = vmatpush1.msra.mxu0 %v47
    %113 = vmatprep.subr.mxu0 %v50
    %114 = vmatpush1.msra.mxu0 %v49
    %115 = vmatprep.subr.mxu0 %v64
    %116 = vmatpush1.msra.mxu0 %v62
    %117 = vmatprep.subr.mxu0 %v65
    %118 = vmatpush1.msra.mxu0 %v63
    %119 = vmatprep.subr.mxu0 0.0
    %120 = vmatpush1.msra.mxu0 0.0
    %121 = vmatprep.subr.mxu0 0.0
    %122 = vmatpush1.msra.mxu0 0.0
    %123 = vmatprep.subr.mxu0 0.0
    %124 = vmatpush1.msra.mxu0 0.0
    %125 = vmatprep.subr.mxu0 0.0
    %126 = vmatpush1.msra.mxu0 0.0
    %127 = vmatprep.subr.mxu0 0.0
    %128 = vmatpush1.msra.mxu0 0.0
    %129 = vmatprep.subr.mxu0 0.0
    %130 = vmatpush1.msra.mxu0 0.0
    %131 = vmatprep.subr.mxu0 0.0
    %132 = vmatpush1.msra.mxu0 0.0
    %133 = vmatprep.subr.mxu0 0.0
    %134 = vmatpush1.msra.mxu0 0.0
    %135 = vmatprep.subr.mxu0 0.0
    %136 = vmatpush1.msra.mxu0 0.0
    %137 = vmatprep.subr.mxu0 0.0
    %138 = vmatpush1.msra.mxu0 0.0
    %139 = vmatprep.subr.mxu0 0.0
    %140 = vmatpush1.msra.mxu0 0.0
    %141 = vmatprep.subr.mxu0 0.0
    %142 = vmatpush1.msra.mxu0 0.0
    %143 = vmatprep.subr.mxu0 0.0
    %144 = vmatpush1.msra.mxu0 0.0
    %145 = vmatprep.subr.mxu0 0.0
    %146 = vmatpush1.msra.mxu0 0.0
    %147 = vmatprep.subr.mxu0 0.0
    %148 = vmatpush1.msra.mxu0 0.0
    %149 = vmatprep.subr.mxu0 0.0
    %150 = vmatpush1.msra.mxu0 0.0
    %151 = vmatprep.subr.mxu0 0.0
    %152 = vmatpush1.msra.mxu0 0.0
    %153 = vmatprep.subr.mxu0 0.0
    %154 = vmatpush1.msra.mxu0 0.0
    %155 = vmatprep.subr.mxu0 0.0
    %156 = vmatpush1.msra.mxu0 0.0
    %157 = vmatprep.subr.mxu0 0.0
    %158 = vmatpush1.msra.mxu0 0.0
    %159 = vmatprep.subr.mxu0 0.0
    %160 = vmatpush1.msra.mxu0 0.0
    %161 = vmatprep.subr.mxu0 0.0
    %162 = vmatpush1.msra.mxu0 0.0
    %163 = vmatprep.subr.mxu0 0.0
    %164 = vmatpush1.msra.mxu0 0.0
    %165 = vmatprep.subr.mxu0 0.0
    %166 = vmatpush1.msra.mxu0 0.0
    %167 = vmatprep.subr.mxu0 0.0
    %168 = vmatpush1.msra.mxu0 0.0
    %169 = vmatprep.subr.mxu0 0.0
    %170 = vmatpush1.msra.mxu0 0.0
    %171 = vmatprep.mubr.f32.mxu0 0.0
    %172 = vmatmul.mubr.f32.gmra.mrb[0].mxu0 %v96
    %v173 = vpop.f32.mrb[0].mxu0
    %v174 = vadd.f32 %v77, %v173
    %v175 = vpop.f32.mrb[0].mxu0
    %v176 = vadd.f32 %v77, %v175
    %177 = vmatprep.mubr.f32.mxu0 0.0
    %178 = vmatmul.mubr.f32.gmra.mrb[0].mxu0 %v99
    %v179 = vpop.f32.mrb[0].mxu0
    %v180 = vadd.f32 %v82, %v179
    %v181 = vpop.f32.mrb[0].mxu0
    %v182 = vadd.f32 %v82, %v181
    %183 = vmatprep.mubr.f32.mxu0 0.0
    %184 = vmatmul.mubr.f32.gmra.mrb[0].mxu0 %v102
    %v185 = vpop.f32.mrb[0].mxu0
    %v186 = vadd.f32 %v87, %v185
    %v187 = vpop.f32.mrb[0].mxu0
    %v188 = vadd.f32 %v87, %v187
    %189 = vmatprep.mubr.f32.mxu0 0.0
    %190 = vmatmul.mubr.f32.gmra.mrb[0].mxu0 %v105
    %v191 = vpop.f32.mrb[0].mxu0
    %v192 = vadd.f32 %v92, %v191
    %v193 = vpop.f32.mrb[0].mxu0
    %v194 = vadd.f32 %v92, %v193
    %195 = vdwg.mxu0
    %v196 = vmax.f32 %v174, 0.0
    %v197 = vmax.f32 %v176, 0.0
    %v198 = vmax.f32 %v180, 0.0
    %v199 = vmax.f32 %v182, 0.0
    %v200 = vmax.f32 %v186, 0.0
    %v201 = vmax.f32 %v188, 0.0
    %v202 = vmax.f32 %v192, 0.0
    %v203 = vmax.f32 %v194, 0.0
    %v204 = vld [vmem:[%s1] sm:$0x3]
    %v205 = vadd.s32 %v204, 4294967295
    %vm206 = vcmp.ge.s32.totalorder %v205, 0
    %vm207 = vcmp.lt.s32.totalorder %v205, 8
    %vm208 = vmand %vm206, %vm207
    %209 = vrot.lane.b32.xlu0 %v196, 1
    %v210 = vpop.permute.xlu0 %209
    %211 = vrot.lane.b32.xlu0 %v198, 1
    %v212 = vpop.permute.xlu0 %211
    %213 = vrot.lane.b32.xlu0 %v200, 1
    %v214 = vpop.permute.xlu0 %213
    %215 = vrot.lane.b32.xlu0 %v202, 1
    %v216 = vpop.permute.xlu0 %215
    %217 = vrot.lane.b32.xlu0 %v197, 1
    %v218 = vpop.permute.xlu0 %217
    %219 = vrot.lane.b32.xlu0 %v199, 1
    %v220 = vpop.permute.xlu0 %219
    %221 = vrot.lane.b32.xlu0 %v201, 1
    %v222 = vpop.permute.xlu0 %221
    %223 = vrot.lane.b32.xlu0 %v203, 1
    %v224 = vpop.permute.xlu0 %223
    %vm225 = vcmp.lt.s32.totalorder %v60, 1
    %v226 = vsel %vm225, %v210, %v218
    %v227 = vsel %vm225, %v212, %v220
    %v228 = vsel %vm225, %v214, %v222
    %v229 = vsel %vm225, %v216, %v224
    %v230 = vsel %vm225, %v218, %v210
    %v231 = vsel %vm225, %v220, %v212
    %v232 = vsel %vm225, %v222, %v214
    %v233 = vsel %vm225, %v224, %v216
    %v234 = vsel %vm208, 1, 0
    %v235 = vlaneseq
    %v236 = vshrl.u32 %v235, 7
    %v237 = vsub.s32 0, %v236
    %v238 = vrot.slane %v234, %v237
    %v239 = vlaneseq
    %v240 = vshrl.u32 %v239, 7
    %v241 = vsub.s32 1, %v240
    %v242 = vrot.slane %v234, %v241
    %vm243 = vcmp.eq.s32.totalorder %v238, 1
    %vm244 = vcmp.eq.s32.totalorder %v242, 1
    %v245 = vsel %vm243, %v230, 0.0
    %v246 = vsel %vm244, %v226, 0.0
    %v247 = vsel %vm243, %v231, 0.0
    %v248 = vsel %vm244, %v227, 0.0
    %v249 = vsel %vm243, %v232, 0.0
    %v250 = vsel %vm244, %v228, 0.0
    %v251 = vsel %vm243, %v233, 0.0
    %v252 = vsel %vm244, %v229, 0.0
    %v253 = vld [vmem:[%s4] sm:$0xff]
    %v254 = vld [vmem:[%s4 + $0x8] sm:$0xff]
    %v255 = vld [vmem:[%s4 + $0x10] sm:$0xff]
    %v256 = vld [vmem:[%s4 + $0x18] sm:$0xff]
    %vm257 = vcmp.ge.s32.totalorder %v204, 0
    %vm258 = vcmp.lt.s32.totalorder %v204, 8
    %vm259 = vmand %vm257, %vm258
    %v260 = vsel %vm259, 1, 0
    %v261 = vlaneseq
    %v262 = vshrl.u32 %v261, 7
    %v263 = vsub.s32 0, %v262
    %v264 = vrot.slane %v260, %v263
    %v265 = vlaneseq
    %v266 = vshrl.u32 %v265, 7
    %v267 = vsub.s32 1, %v266
    %v268 = vrot.slane %v260, %v267
    %vm269 = vcmp.eq.s32.totalorder %v264, 1
    %vm270 = vcmp.eq.s32.totalorder %v268, 1
    %v271 = vsel %vm269, %v196, 0.0
    %v272 = vsel %vm270, %v197, 0.0
    %v273 = vsel %vm269, %v198, 0.0
    %v274 = vsel %vm270, %v199, 0.0
    %v275 = vsel %vm269, %v200, 0.0
    %v276 = vsel %vm270, %v201, 0.0
    %v277 = vsel %vm269, %v202, 0.0
    %v278 = vsel %vm270, %v203, 0.0
    %s279 = scalar_lea.vmem %s4, 32
    %v280 = vld [vmem:[%s279] sm:$0xff]
    %v281 = vld [vmem:[%s279 + $0x8] sm:$0xff]
    %v282 = vld [vmem:[%s279 + $0x10] sm:$0xff]
    %v283 = vld [vmem:[%s279 + $0x18] sm:$0xff]
    %vm284 = vcmask 261120
    %v286 = vsel %vm284, %v280, 0
    %v289 = vsel %vm284, %v281, 0
    %v292 = vsel %vm284, %v282, 0
    %v295 = vsel %vm284, %v283, 0
    %297 = vmatprep.subr.mxu0 %v272
    %298 = vmatpush1.msra.mxu0 %v271
    %299 = vmatprep.subr.mxu0 %v274
    %300 = vmatpush1.msra.mxu0 %v273
    %301 = vmatprep.subr.mxu0 %v276
    %302 = vmatpush1.msra.mxu0 %v275
    %303 = vmatprep.subr.mxu0 %v278
    %304 = vmatpush1.msra.mxu0 %v277
    %305 = vmatprep.subr.mxu0 0.0
    %306 = vmatpush1.msra.mxu0 0.0
    %307 = vmatprep.subr.mxu0 0.0
    %308 = vmatpush1.msra.mxu0 0.0
    %309 = vmatprep.subr.mxu0 0.0
    %310 = vmatpush1.msra.mxu0 0.0
    %311 = vmatprep.subr.mxu0 0.0
    %312 = vmatpush1.msra.mxu0 0.0
    %313 = vmatprep.subr.mxu0 0.0
    %314 = vmatpush1.msra.mxu0 0.0
    %315 = vmatprep.subr.mxu0 0.0
    %316 = vmatpush1.msra.mxu0 0.0
    %317 = vmatprep.subr.mxu0 0.0
    %318 = vmatpush1.msra.mxu0 0.0
    %319 = vmatprep.subr.mxu0 0.0
    %320 = vmatpush1.msra.mxu0 0.0
    %321 = vmatprep.subr.mxu0 0.0
    %322 = vmatpush1.msra.mxu0 0.0
    %323 = vmatprep.subr.mxu0 0.0
    %324 = vmatpush1.msra.mxu0 0.0
    %325 = vmatprep.subr.mxu0 0.0
    %326 = vmatpush1.msra.mxu0 0.0
    %327 = vmatprep.subr.mxu0 0.0
    %328 = vmatpush1.msra.mxu0 0.0
    %329 = vmatprep.subr.mxu0 0.0
    %330 = vmatpush1.msra.mxu0 0.0
    %331 = vmatprep.subr.mxu0 0.0
    %332 = vmatpush1.msra.mxu0 0.0
    %333 = vmatprep.subr.mxu0 0.0
    %334 = vmatpush1.msra.mxu0 0.0
    %335 = vmatprep.subr.mxu0 0.0
    %336 = vmatpush1.msra.mxu0 0.0
    %337 = vmatprep.subr.mxu0 0.0
    %338 = vmatpush1.msra.mxu0 0.0
    %339 = vmatprep.subr.mxu0 0.0
    %340 = vmatpush1.msra.mxu0 0.0
    %341 = vmatprep.subr.mxu0 0.0
    %342 = vmatpush1.msra.mxu0 0.0
    %343 = vmatprep.subr.mxu0 0.0
    %344 = vmatpush1.msra.mxu0 0.0
    %345 = vmatprep.subr.mxu0 0.0
    %346 = vmatpush1.msra.mxu0 0.0
    %347 = vmatprep.subr.mxu0 0.0
    %348 = vmatpush1.msra.mxu0 0.0
    %349 = vmatprep.subr.mxu0 0.0
    %350 = vmatpush1.msra.mxu0 0.0
    %351 = vmatprep.subr.mxu0 0.0
    %352 = vmatpush1.msra.mxu0 0.0
    %353 = vmatprep.subr.mxu0 0.0
    %354 = vmatpush1.msra.mxu0 0.0
    %355 = vmatprep.subr.mxu0 0.0
    %356 = vmatpush1.msra.mxu0 0.0
    %357 = vmatprep.subr.mxu0 0.0
    %358 = vmatpush1.msra.mxu0 0.0
    %359 = vmatprep.subr.mxu0 0.0
    %360 = vmatpush1.msra.mxu0 0.0
    %361 = vmatprep.mubr.f32.mxu0 0.0
    %362 = vmatmul.mubr.f32.gmra.mrb[0].mxu0 %v286
    %v363 = vpop.f32.mrb[0].mxu0
    %v364 = vadd.f32 0.0, %v363
    %v365 = vpop.f32.mrb[0].mxu0
    %v366 = vadd.f32 0.0, %v365
    %367 = vmatprep.mubr.f32.mxu0 0.0
    %368 = vmatmul.mubr.f32.gmra.mrb[0].mxu0 %v289
    %v369 = vpop.f32.mrb[0].mxu0
    %v370 = vadd.f32 0.0, %v369
    %v371 = vpop.f32.mrb[0].mxu0
    %v372 = vadd.f32 0.0, %v371
    %373 = vmatprep.mubr.f32.mxu0 0.0
    %374 = vmatmul.mubr.f32.gmra.mrb[0].mxu0 %v292
    %v375 = vpop.f32.mrb[0].mxu0
    %v376 = vadd.f32 0.0, %v375
    %v377 = vpop.f32.mrb[0].mxu0
    %v378 = vadd.f32 0.0, %v377
    %379 = vmatprep.mubr.f32.mxu0 0.0
    %380 = vmatmul.mubr.f32.gmra.mrb[0].mxu0 %v295
    %v381 = vpop.f32.mrb[0].mxu0
    %v382 = vadd.f32 0.0, %v381
    %v383 = vpop.f32.mrb[0].mxu0
    %v384 = vadd.f32 0.0, %v383
    %385 = vdwg.mxu0
    %v387 = vsel %vm284, %v253, 0
    %v390 = vsel %vm284, %v254, 0
    %v393 = vsel %vm284, %v255, 0
    %v396 = vsel %vm284, %v256, 0
    %398 = vmatprep.subr.mxu0 %v246
    %399 = vmatpush1.msra.mxu0 %v245
    %400 = vmatprep.subr.mxu0 %v248
    %401 = vmatpush1.msra.mxu0 %v247
    %402 = vmatprep.subr.mxu0 %v250
    %403 = vmatpush1.msra.mxu0 %v249
    %404 = vmatprep.subr.mxu0 %v252
    %405 = vmatpush1.msra.mxu0 %v251
    %406 = vmatprep.subr.mxu0 0.0
    %407 = vmatpush1.msra.mxu0 0.0
    %408 = vmatprep.subr.mxu0 0.0
    %409 = vmatpush1.msra.mxu0 0.0
    %410 = vmatprep.subr.mxu0 0.0
    %411 = vmatpush1.msra.mxu0 0.0
    %412 = vmatprep.subr.mxu0 0.0
    %413 = vmatpush1.msra.mxu0 0.0
    %414 = vmatprep.subr.mxu0 0.0
    %415 = vmatpush1.msra.mxu0 0.0
    %416 = vmatprep.subr.mxu0 0.0
    %417 = vmatpush1.msra.mxu0 0.0
    %418 = vmatprep.subr.mxu0 0.0
    %419 = vmatpush1.msra.mxu0 0.0
    %420 = vmatprep.subr.mxu0 0.0
    %421 = vmatpush1.msra.mxu0 0.0
    %422 = vmatprep.subr.mxu0 0.0
    %423 = vmatpush1.msra.mxu0 0.0
    %424 = vmatprep.subr.mxu0 0.0
    %425 = vmatpush1.msra.mxu0 0.0
    %426 = vmatprep.subr.mxu0 0.0
    %427 = vmatpush1.msra.mxu0 0.0
    %428 = vmatprep.subr.mxu0 0.0
    %429 = vmatpush1.msra.mxu0 0.0
    %430 = vmatprep.subr.mxu0 0.0
    %431 = vmatpush1.msra.mxu0 0.0
    %432 = vmatprep.subr.mxu0 0.0
    %433 = vmatpush1.msra.mxu0 0.0
    %434 = vmatprep.subr.mxu0 0.0
    %435 = vmatpush1.msra.mxu0 0.0
    %436 = vmatprep.subr.mxu0 0.0
    %437 = vmatpush1.msra.mxu0 0.0
    %438 = vmatprep.subr.mxu0 0.0
    %439 = vmatpush1.msra.mxu0 0.0
    %440 = vmatprep.subr.mxu0 0.0
    %441 = vmatpush1.msra.mxu0 0.0
    %442 = vmatprep.subr.mxu0 0.0
    %443 = vmatpush1.msra.mxu0 0.0
    %444 = vmatprep.subr.mxu0 0.0
    %445 = vmatpush1.msra.mxu0 0.0
    %446 = vmatprep.subr.mxu0 0.0
    %447 = vmatpush1.msra.mxu0 0.0
    %448 = vmatprep.subr.mxu0 0.0
    %449 = vmatpush1.msra.mxu0 0.0
    %450 = vmatprep.subr.mxu0 0.0
    %451 = vmatpush1.msra.mxu0 0.0
    %452 = vmatprep.subr.mxu0 0.0
    %453 = vmatpush1.msra.mxu0 0.0
    %454 = vmatprep.subr.mxu0 0.0
    %455 = vmatpush1.msra.mxu0 0.0
    %456 = vmatprep.subr.mxu0 0.0
    %457 = vmatpush1.msra.mxu0 0.0
    %458 = vmatprep.subr.mxu0 0.0
    %459 = vmatpush1.msra.mxu0 0.0
    %460 = vmatprep.subr.mxu0 0.0
    %461 = vmatpush1.msra.mxu0 0.0
    %462 = vmatprep.mubr.f32.mxu0 0.0
    %463 = vmatmul.mubr.f32.gmra.mrb[0].mxu0 %v387
    %v464 = vpop.f32.mrb[0].mxu0
    %v465 = vadd.f32 %v364, %v464
    %v466 = vpop.f32.mrb[0].mxu0
    %v467 = vadd.f32 %v366, %v466
    %468 = vmatprep.mubr.f32.mxu0 0.0
    %469 = vmatmul.mubr.f32.gmra.mrb[0].mxu0 %v390
    %v470 = vpop.f32.mrb[0].mxu0
    %v471 = vadd.f32 %v370, %v470
    %v472 = vpop.f32.mrb[0].mxu0
    %v473 = vadd.f32 %v372, %v472
    %474 = vmatprep.mubr.f32.mxu0 0.0
    %475 = vmatmul.mubr.f32.gmra.mrb[0].mxu0 %v393
    %v476 = vpop.f32.mrb[0].mxu0
    %v477 = vadd.f32 %v376, %v476
    %v478 = vpop.f32.mrb[0].mxu0
    %v479 = vadd.f32 %v378, %v478
    %480 = vmatprep.mubr.f32.mxu0 0.0
    %481 = vmatmul.mubr.f32.gmra.mrb[0].mxu0 %v396
    %v482 = vpop.f32.mrb[0].mxu0
    %v483 = vadd.f32 %v382, %v482
    %v484 = vpop.f32.mrb[0].mxu0
    %v485 = vadd.f32 %v384, %v484
    %486 = vdwg.mxu0
    %v487 = vadd.s32 %v204, 1
    %vm488 = vcmp.ge.s32.totalorder %v487, 0
    %vm489 = vcmp.lt.s32.totalorder %v487, 8
    %vm490 = vmand %vm488, %vm489
    %491 = vrot.lane.b32.xlu0 %v196, 127
    %v492 = vpop.permute.xlu0 %491
    %493 = vrot.lane.b32.xlu0 %v198, 127
    %v494 = vpop.permute.xlu0 %493
    %495 = vrot.lane.b32.xlu0 %v200, 127
    %v496 = vpop.permute.xlu0 %495
    %497 = vrot.lane.b32.xlu0 %v202, 127
    %v498 = vpop.permute.xlu0 %497
    %499 = vrot.lane.b32.xlu0 %v197, 127
    %v500 = vpop.permute.xlu0 %499
    %501 = vrot.lane.b32.xlu0 %v199, 127
    %v502 = vpop.permute.xlu0 %501
    %503 = vrot.lane.b32.xlu0 %v201, 127
    %v504 = vpop.permute.xlu0 %503
    %505 = vrot.lane.b32.xlu0 %v203, 127
    %v506 = vpop.permute.xlu0 %505
    %v507 = vsel %vm61, %v492, %v500
    %v508 = vsel %vm61, %v494, %v502
    %v509 = vsel %vm61, %v496, %v504
    %v510 = vsel %vm61, %v498, %v506
    %v511 = vsel %vm61, %v500, %v492
    %v512 = vsel %vm61, %v502, %v494
    %v513 = vsel %vm61, %v504, %v496
    %v514 = vsel %vm61, %v506, %v498
    %v515 = vsel %vm490, 1, 0
    %v516 = vlaneseq
    %v517 = vshrl.u32 %v516, 7
    %v518 = vsub.s32 0, %v517
    %v519 = vrot.slane %v515, %v518
    %v520 = vlaneseq
    %v521 = vshrl.u32 %v520, 7
    %v522 = vsub.s32 1, %v521
    %v523 = vrot.slane %v515, %v522
    %vm524 = vcmp.eq.s32.totalorder %v519, 1
    %vm525 = vcmp.eq.s32.totalorder %v523, 1
    %v526 = vsel %vm524, %v507, 0.0
    %v527 = vsel %vm525, %v511, 0.0
    %v528 = vsel %vm524, %v508, 0.0
    %v529 = vsel %vm525, %v512, 0.0
    %v530 = vsel %vm524, %v509, 0.0
    %v531 = vsel %vm525, %v513, 0.0
    %v532 = vsel %vm524, %v510, 0.0
    %v533 = vsel %vm525, %v514, 0.0
    %s534 = scalar_lea.vmem %s4, 64
    %v535 = vld [vmem:[%s534] sm:$0xff]
    %v536 = vld [vmem:[%s534 + $0x8] sm:$0xff]
    %v537 = vld [vmem:[%s534 + $0x10] sm:$0xff]
    %v538 = vld [vmem:[%s534 + $0x18] sm:$0xff]
    %v540 = vsel %vm284, %v535, 0
    %v543 = vsel %vm284, %v536, 0
    %v546 = vsel %vm284, %v537, 0
    %v549 = vsel %vm284, %v538, 0
    %551 = vmatprep.subr.mxu0 %v527
    %552 = vmatpush1.msra.mxu0 %v526
    %553 = vmatprep.subr.mxu0 %v529
    %554 = vmatpush1.msra.mxu0 %v528
    %555 = vmatprep.subr.mxu0 %v531
    %556 = vmatpush1.msra.mxu0 %v530
    %557 = vmatprep.subr.mxu0 %v533
    %558 = vmatpush1.msra.mxu0 %v532
    %559 = vmatprep.subr.mxu0 0.0
    %560 = vmatpush1.msra.mxu0 0.0
    %561 = vmatprep.subr.mxu0 0.0
    %562 = vmatpush1.msra.mxu0 0.0
    %563 = vmatprep.subr.mxu0 0.0
    %564 = vmatpush1.msra.mxu0 0.0
    %565 = vmatprep.subr.mxu0 0.0
    %566 = vmatpush1.msra.mxu0 0.0
    %567 = vmatprep.subr.mxu0 0.0
    %568 = vmatpush1.msra.mxu0 0.0
    %569 = vmatprep.subr.mxu0 0.0
    %570 = vmatpush1.msra.mxu0 0.0
    %571 = vmatprep.subr.mxu0 0.0
    %572 = vmatpush1.msra.mxu0 0.0
    %573 = vmatprep.subr.mxu0 0.0
    %574 = vmatpush1.msra.mxu0 0.0
    %575 = vmatprep.subr.mxu0 0.0
    %576 = vmatpush1.msra.mxu0 0.0
    %577 = vmatprep.subr.mxu0 0.0
    %578 = vmatpush1.msra.mxu0 0.0
    %579 = vmatprep.subr.mxu0 0.0
    %580 = vmatpush1.msra.mxu0 0.0
    %581 = vmatprep.subr.mxu0 0.0
    %582 = vmatpush1.msra.mxu0 0.0
    %583 = vmatprep.subr.mxu0 0.0
    %584 = vmatpush1.msra.mxu0 0.0
    %585 = vmatprep.subr.mxu0 0.0
    %586 = vmatpush1.msra.mxu0 0.0
    %587 = vmatprep.subr.mxu0 0.0
    %588 = vmatpush1.msra.mxu0 0.0
    %589 = vmatprep.subr.mxu0 0.0
    %590 = vmatpush1.msra.mxu0 0.0
    %591 = vmatprep.subr.mxu0 0.0
    %592 = vmatpush1.msra.mxu0 0.0
    %593 = vmatprep.subr.mxu0 0.0
    %594 = vmatpush1.msra.mxu0 0.0
    %595 = vmatprep.subr.mxu0 0.0
    %596 = vmatpush1.msra.mxu0 0.0
    %597 = vmatprep.subr.mxu0 0.0
    %598 = vmatpush1.msra.mxu0 0.0
    %599 = vmatprep.subr.mxu0 0.0
    %600 = vmatpush1.msra.mxu0 0.0
    %601 = vmatprep.subr.mxu0 0.0
    %602 = vmatpush1.msra.mxu0 0.0
    %603 = vmatprep.subr.mxu0 0.0
    %604 = vmatpush1.msra.mxu0 0.0
    %605 = vmatprep.subr.mxu0 0.0
    %606 = vmatpush1.msra.mxu0 0.0
    %607 = vmatprep.subr.mxu0 0.0
    %608 = vmatpush1.msra.mxu0 0.0
    %609 = vmatprep.subr.mxu0 0.0
    %610 = vmatpush1.msra.mxu0 0.0
    %611 = vmatprep.subr.mxu0 0.0
    %612 = vmatpush1.msra.mxu0 0.0
    %613 = vmatprep.subr.mxu0 0.0
    %614 = vmatpush1.msra.mxu0 0.0
    %615 = vmatprep.mubr.f32.mxu0 0.0
    %616 = vmatmul.mubr.f32.gmra.mrb[0].mxu0 %v540
    %v617 = vpop.f32.mrb[0].mxu0
    %v618 = vadd.f32 0.0, %v617
    %v619 = vpop.f32.mrb[0].mxu0
    %v620 = vadd.f32 0.0, %v619
    %621 = vmatprep.mubr.f32.mxu0 0.0
    %622 = vmatmul.mubr.f32.gmra.mrb[0].mxu0 %v543
    %v623 = vpop.f32.mrb[0].mxu0
    %v624 = vadd.f32 0.0, %v623
    %v625 = vpop.f32.mrb[0].mxu0
    %v626 = vadd.f32 0.0, %v625
    %627 = vmatprep.mubr.f32.mxu0 0.0
    %628 = vmatmul.mubr.f32.gmra.mrb[0].mxu0 %v546
    %v629 = vpop.f32.mrb[0].mxu0
    %v630 = vadd.f32 0.0, %v629
    %v631 = vpop.f32.mrb[0].mxu0
    %v632 = vadd.f32 0.0, %v631
    %633 = vmatprep.mubr.f32.mxu0 0.0
    %634 = vmatmul.mubr.f32.gmra.mrb[0].mxu0 %v549
    %v635 = vpop.f32.mrb[0].mxu0
    %v636 = vadd.f32 0.0, %v635
    %v637 = vpop.f32.mrb[0].mxu0
    %v638 = vadd.f32 0.0, %v637
    %639 = vdwg.mxu0
    %v640 = vadd.f32 %v465, %v618
    %v641 = vadd.f32 %v467, %v620
    %v642 = vadd.f32 %v471, %v624
    %v643 = vadd.f32 %v473, %v626
    %v644 = vadd.f32 %v477, %v630
    %v645 = vadd.f32 %v479, %v632
    %v646 = vadd.f32 %v483, %v636
    %v647 = vadd.f32 %v485, %v638
    %v648 = vld [vmem:[%s5] sm:$0xff]
    %v649 = vld [vmem:[%s5 + $0x8] sm:$0xff]
    %v650 = vld [vmem:[%s5 + $0x10] sm:$0xff]
    %v651 = vld [vmem:[%s5 + $0x18] sm:$0xff]
    %653 = vset.pattern.permute.xlu0 0
    %654 = vperm.xlu0 %653, %v648
    %v655 = vpop.permute.xlu0 %654
    %658 = vset.pattern.permute.xlu0 0
    %659 = vperm.xlu0 %658, %v649
    %v660 = vpop.permute.xlu0 %659
    %663 = vset.pattern.permute.xlu0 0
    %664 = vperm.xlu0 %663, %v650
    %v665 = vpop.permute.xlu0 %664
    %668 = vset.pattern.permute.xlu0 0
    %669 = vperm.xlu0 %668, %v651
    %v670 = vpop.permute.xlu0 %669
    %v672 = vadd.f32 %v640, %v655
    %v673 = vadd.f32 %v641, %v655
    %v674 = vadd.f32 %v642, %v660
    %v675 = vadd.f32 %v643, %v660
    %v676 = vadd.f32 %v644, %v665
    %v677 = vadd.f32 %v645, %v665
    %v678 = vadd.f32 %v646, %v670
    %v679 = vadd.f32 %v647, %v670
    %v680 = vld [vmem:[%s10] sm:$0xff]
    %v681 = vld [vmem:[%s10 + $0x8] sm:$0xff]
    %v682 = vld [vmem:[%s10 + $0x10] sm:$0xff]
    %v683 = vld [vmem:[%s10 + $0x18] sm:$0xff]
    %v684 = vld [vmem:[%s11] sm:$0xff]
    %v685 = vld [vmem:[%s11 + $0x8] sm:$0xff]
    %v686 = vld [vmem:[%s11 + $0x10] sm:$0xff]
    %v687 = vld [vmem:[%s11 + $0x18] sm:$0xff]
    %689 = vset.pattern.permute.xlu0 0
    %690 = vperm.xlu0 %689, %v684
    %v691 = vpop.permute.xlu0 %690
    %694 = vset.pattern.permute.xlu0 0
    %695 = vperm.xlu0 %694, %v685
    %v696 = vpop.permute.xlu0 %695
    %699 = vset.pattern.permute.xlu0 0
    %700 = vperm.xlu0 %699, %v686
    %v701 = vpop.permute.xlu0 %700
    %704 = vset.pattern.permute.xlu0 0
    %705 = vperm.xlu0 %704, %v687
    %v706 = vpop.permute.xlu0 %705
    %vm708 = vcmask 130048
    %v710 = vsel %vm708, %v680, 0
    %v713 = vsel %vm708, %v681, 0
    %v716 = vsel %vm708, %v682, 0
    %v719 = vsel %vm708, %v683, 0
    %721 = vmatprep.subr.mxu0 %v48
    %722 = vmatpush1.msra.mxu0 %v47
    %723 = vmatprep.subr.mxu0 %v50
    %724 = vmatpush1.msra.mxu0 %v49
    %725 = vmatprep.subr.mxu0 0.0
    %726 = vmatpush1.msra.mxu0 0.0
    %727 = vmatprep.subr.mxu0 0.0
    %728 = vmatpush1.msra.mxu0 0.0
    %729 = vmatprep.subr.mxu0 0.0
    %730 = vmatpush1.msra.mxu0 0.0
    %731 = vmatprep.subr.mxu0 0.0
    %732 = vmatpush1.msra.mxu0 0.0
    %733 = vmatprep.subr.mxu0 0.0
    %734 = vmatpush1.msra.mxu0 0.0
    %735 = vmatprep.subr.mxu0 0.0
    %736 = vmatpush1.msra.mxu0 0.0
    %737 = vmatprep.subr.mxu0 0.0
    %738 = vmatpush1.msra.mxu0 0.0
    %739 = vmatprep.subr.mxu0 0.0
    %740 = vmatpush1.msra.mxu0 0.0
    %741 = vmatprep.subr.mxu0 0.0
    %742 = vmatpush1.msra.mxu0 0.0
    %743 = vmatprep.subr.mxu0 0.0
    %744 = vmatpush1.msra.mxu0 0.0
    %745 = vmatprep.subr.mxu0 0.0
    %746 = vmatpush1.msra.mxu0 0.0
    %747 = vmatprep.subr.mxu0 0.0
    %748 = vmatpush1.msra.mxu0 0.0
    %749 = vmatprep.subr.mxu0 0.0
    %750 = vmatpush1.msra.mxu0 0.0
    %751 = vmatprep.subr.mxu0 0.0
    %752 = vmatpush1.msra.mxu0 0.0
    %753 = vmatprep.subr.mxu0 0.0
    %754 = vmatpush1.msra.mxu0 0.0
    %755 = vmatprep.subr.mxu0 0.0
    %756 = vmatpush1.msra.mxu0 0.0
    %757 = vmatprep.subr.mxu0 0.0
    %758 = vmatpush1.msra.mxu0 0.0
    %759 = vmatprep.subr.mxu0 0.0
    %760 = vmatpush1.msra.mxu0 0.0
    %761 = vmatprep.subr.mxu0 0.0
    %762 = vmatpush1.msra.mxu0 0.0
    %763 = vmatprep.subr.mxu0 0.0
    %764 = vmatpush1.msra.mxu0 0.0
    %765 = vmatprep.subr.mxu0 0.0
    %766 = vmatpush1.msra.mxu0 0.0
    %767 = vmatprep.subr.mxu0 0.0
    %768 = vmatpush1.msra.mxu0 0.0
    %769 = vmatprep.subr.mxu0 0.0
    %770 = vmatpush1.msra.mxu0 0.0
    %771 = vmatprep.subr.mxu0 0.0
    %772 = vmatpush1.msra.mxu0 0.0
    %773 = vmatprep.subr.mxu0 0.0
    %774 = vmatpush1.msra.mxu0 0.0
    %775 = vmatprep.subr.mxu0 0.0
    %776 = vmatpush1.msra.mxu0 0.0
    %777 = vmatprep.subr.mxu0 0.0
    %778 = vmatpush1.msra.mxu0 0.0
    %779 = vmatprep.subr.mxu0 0.0
    %780 = vmatpush1.msra.mxu0 0.0
    %781 = vmatprep.subr.mxu0 0.0
    %782 = vmatpush1.msra.mxu0 0.0
    %783 = vmatprep.subr.mxu0 0.0
    %784 = vmatpush1.msra.mxu0 0.0
    %785 = vmatprep.mubr.f32.mxu0 0.0
    %786 = vmatmul.mubr.f32.gmra.mrb[0].mxu0 %v710
    %v787 = vpop.f32.mrb[0].mxu0
    %v788 = vadd.f32 %v691, %v787
    %v789 = vpop.f32.mrb[0].mxu0
    %v790 = vadd.f32 %v691, %v789
    %791 = vmatprep.mubr.f32.mxu0 0.0
    %792 = vmatmul.mubr.f32.gmra.mrb[0].mxu0 %v713
    %v793 = vpop.f32.mrb[0].mxu0
    %v794 = vadd.f32 %v696, %v793
    %v795 = vpop.f32.mrb[0].mxu0
    %v796 = vadd.f32 %v696, %v795
    %797 = vmatprep.mubr.f32.mxu0 0.0
    %798 = vmatmul.mubr.f32.gmra.mrb[0].mxu0 %v716
    %v799 = vpop.f32.mrb[0].mxu0
    %v800 = vadd.f32 %v701, %v799
    %v801 = vpop.f32.mrb[0].mxu0
    %v802 = vadd.f32 %v701, %v801
    %803 = vmatprep.mubr.f32.mxu0 0.0
    %804 = vmatmul.mubr.f32.gmra.mrb[0].mxu0 %v719
    %v805 = vpop.f32.mrb[0].mxu0
    %v806 = vadd.f32 %v706, %v805
    %v807 = vpop.f32.mrb[0].mxu0
    %v808 = vadd.f32 %v706, %v807
    %809 = vdwg.mxu0
    %vm810 = vcmp.lt.s32.totalorder %v60, 8
    %v811 = vsel %vm810, 1, 0
    %vm812 = vcmp.eq.s32.totalorder %v811, 1
    %v813 = vsel %vm812, %v672, 0.0
    %v814 = vsel %vm812, %v674, 0.0
    %v815 = vsel %vm812, %v676, 0.0
    %v816 = vsel %vm812, %v678, 0.0
    %817 = vadd.xlane.f32.xlu0 %v813
    %v818 = vpop.xlane.xlu0 %817
    %819 = vadd.xlane.f32.xlu0 %v814
    %v820 = vpop.xlane.xlu0 %819
    %821 = vadd.xlane.f32.xlu0 %v815
    %v822 = vpop.xlane.xlu0 %821
    %823 = vadd.xlane.f32.xlu0 %v816
    %v824 = vpop.xlane.xlu0 %823
    %v825 = vsel %vm812, %v673, 0.0
    %v826 = vsel %vm812, %v675, 0.0
    %v827 = vsel %vm812, %v677, 0.0
    %v828 = vsel %vm812, %v679, 0.0
    %829 = vadd.xlane.f32.xlu0 %v825
    %v830 = vpop.xlane.xlu0 %829
    %831 = vadd.xlane.f32.xlu0 %v826
    %v832 = vpop.xlane.xlu0 %831
    %833 = vadd.xlane.f32.xlu0 %v827
    %v834 = vpop.xlane.xlu0 %833
    %835 = vadd.xlane.f32.xlu0 %v828
    %v836 = vpop.xlane.xlu0 %835
    %vm837 = vcmask 7168
    %v838 = vsel %vm837, %v818, %v830
    %v839 = vsel %vm837, %v820, %v832
    %v840 = vsel %vm837, %v822, %v834
    %v841 = vsel %vm837, %v824, %v836
    %v842 = vld [vmem:[%s6] sm:$0x3]
    %v843 = vld [vmem:[%s7] sm:$0x3]
    %845 = vset.pattern.permute.xlu0 0
    %846 = vperm.xlu0 %845, %v843
    %v847 = vpop.permute.xlu0 %846
    %v850 = vsel %vm284, %v842, 0
    %852 = vmatprep.subr.mxu0 0.0
    %853 = vmatpush1.msra.mxu0 %v838
    %854 = vmatprep.subr.mxu0 0.0
    %855 = vmatpush1.msra.mxu0 %v839
    %856 = vmatprep.subr.mxu0 0.0
    %857 = vmatpush1.msra.mxu0 %v840
    %858 = vmatprep.subr.mxu0 0.0
    %859 = vmatpush1.msra.mxu0 %v841
    %860 = vmatprep.subr.mxu0 0.0
    %861 = vmatpush1.msra.mxu0 0.0
    %862 = vmatprep.subr.mxu0 0.0
    %863 = vmatpush1.msra.mxu0 0.0
    %864 = vmatprep.subr.mxu0 0.0
    %865 = vmatpush1.msra.mxu0 0.0
    %866 = vmatprep.subr.mxu0 0.0
    %867 = vmatpush1.msra.mxu0 0.0
    %868 = vmatprep.subr.mxu0 0.0
    %869 = vmatpush1.msra.mxu0 0.0
    %870 = vmatprep.subr.mxu0 0.0
    %871 = vmatpush1.msra.mxu0 0.0
    %872 = vmatprep.subr.mxu0 0.0
    %873 = vmatpush1.msra.mxu0 0.0
    %874 = vmatprep.subr.mxu0 0.0
    %875 = vmatpush1.msra.mxu0 0.0
    %876 = vmatprep.subr.mxu0 0.0
    %877 = vmatpush1.msra.mxu0 0.0
    %878 = vmatprep.subr.mxu0 0.0
    %879 = vmatpush1.msra.mxu0 0.0
    %880 = vmatprep.subr.mxu0 0.0
    %881 = vmatpush1.msra.mxu0 0.0
    %882 = vmatprep.subr.mxu0 0.0
    %883 = vmatpush1.msra.mxu0 0.0
    %884 = vmatprep.subr.mxu0 0.0
    %885 = vmatpush1.msra.mxu0 0.0
    %886 = vmatprep.subr.mxu0 0.0
    %887 = vmatpush1.msra.mxu0 0.0
    %888 = vmatprep.subr.mxu0 0.0
    %889 = vmatpush1.msra.mxu0 0.0
    %890 = vmatprep.subr.mxu0 0.0
    %891 = vmatpush1.msra.mxu0 0.0
    %892 = vmatprep.subr.mxu0 0.0
    %893 = vmatpush1.msra.mxu0 0.0
    %894 = vmatprep.subr.mxu0 0.0
    %895 = vmatpush1.msra.mxu0 0.0
    %896 = vmatprep.subr.mxu0 0.0
    %897 = vmatpush1.msra.mxu0 0.0
    %898 = vmatprep.subr.mxu0 0.0
    %899 = vmatpush1.msra.mxu0 0.0
    %900 = vmatprep.subr.mxu0 0.0
    %901 = vmatpush1.msra.mxu0 0.0
    %902 = vmatprep.subr.mxu0 0.0
    %903 = vmatpush1.msra.mxu0 0.0
    %904 = vmatprep.subr.mxu0 0.0
    %905 = vmatpush1.msra.mxu0 0.0
    %906 = vmatprep.subr.mxu0 0.0
    %907 = vmatpush1.msra.mxu0 0.0
    %908 = vmatprep.subr.mxu0 0.0
    %909 = vmatpush1.msra.mxu0 0.0
    %910 = vmatprep.subr.mxu0 0.0
    %911 = vmatpush1.msra.mxu0 0.0
    %912 = vmatprep.subr.mxu0 0.0
    %913 = vmatpush1.msra.mxu0 0.0
    %914 = vmatprep.subr.mxu0 0.0
    %915 = vmatpush1.msra.mxu0 0.0
    %916 = vmatprep.mubr.f32.mxu0 0.0
    %917 = vmatmul.mubr.f32.gmra.mrb[0].mxu0 %v850
    %v918 = vpop.f32.mrb[0].mxu0
    %v919 = vadd.f32 %v847, %v918
    %v920 = vpop.f32.mrb[0].mxu0
    %921 = vdwg.mxu0
    %v922 = vmax.f32 %v919, 0.0
    %v923 = vld [vmem:[%s8] sm:$0xff]
    %v924 = vld [vmem:[%s8 + $0x8] sm:$0xff]
    %v925 = vld [vmem:[%s8 + $0x10] sm:$0xff]
    %v926 = vld [vmem:[%s8 + $0x18] sm:$0xff]
    %v927 = vld [vmem:[%s9] sm:$0xff]
    %v928 = vld [vmem:[%s9 + $0x8] sm:$0xff]
    %v929 = vld [vmem:[%s9 + $0x10] sm:$0xff]
    %v930 = vld [vmem:[%s9 + $0x18] sm:$0xff]
    %932 = vset.pattern.permute.xlu0 0
    %933 = vperm.xlu0 %932, %v927
    %v934 = vpop.permute.xlu0 %933
    %937 = vset.pattern.permute.xlu0 0
    %938 = vperm.xlu0 %937, %v928
    %v939 = vpop.permute.xlu0 %938
    %942 = vset.pattern.permute.xlu0 0
    %943 = vperm.xlu0 %942, %v929
    %v944 = vpop.permute.xlu0 %943
    %947 = vset.pattern.permute.xlu0 0
    %948 = vperm.xlu0 %947, %v930
    %v949 = vpop.permute.xlu0 %948
    %vm951 = vcmask 15360
    %v953 = vsel %vm951, %v923, 0
    %v956 = vsel %vm951, %v924, 0
    %v959 = vsel %vm951, %v925, 0
    %v962 = vsel %vm951, %v926, 0
    %vm964 = vcmask 1041408
    %v966 = vsel %vm964, %v922, 0
    %968 = vmatprep.subr.mxu0 0.0
    %969 = vmatpush1.msra.mxu0 %v966
    %970 = vmatprep.subr.mxu0 0.0
    %971 = vmatpush1.msra.mxu0 0.0
    %972 = vmatprep.subr.mxu0 0.0
    %973 = vmatpush1.msra.mxu0 0.0
    %974 = vmatprep.subr.mxu0 0.0
    %975 = vmatpush1.msra.mxu0 0.0
    %976 = vmatprep.subr.mxu0 0.0
    %977 = vmatpush1.msra.mxu0 0.0
    %978 = vmatprep.subr.mxu0 0.0
    %979 = vmatpush1.msra.mxu0 0.0
    %980 = vmatprep.subr.mxu0 0.0
    %981 = vmatpush1.msra.mxu0 0.0
    %982 = vmatprep.subr.mxu0 0.0
    %983 = vmatpush1.msra.mxu0 0.0
    %984 = vmatprep.subr.mxu0 0.0
    %985 = vmatpush1.msra.mxu0 0.0
    %986 = vmatprep.subr.mxu0 0.0
    %987 = vmatpush1.msra.mxu0 0.0
    %988 = vmatprep.subr.mxu0 0.0
    %989 = vmatpush1.msra.mxu0 0.0
    %990 = vmatprep.subr.mxu0 0.0
    %991 = vmatpush1.msra.mxu0 0.0
    %992 = vmatprep.subr.mxu0 0.0
    %993 = vmatpush1.msra.mxu0 0.0
    %994 = vmatprep.subr.mxu0 0.0
    %995 = vmatpush1.msra.mxu0 0.0
    %996 = vmatprep.subr.mxu0 0.0
    %997 = vmatpush1.msra.mxu0 0.0
    %998 = vmatprep.subr.mxu0 0.0
    %999 = vmatpush1.msra.mxu0 0.0
    %1000 = vmatprep.subr.mxu0 0.0
    %1001 = vmatpush1.msra.mxu0 0.0
    %1002 = vmatprep.subr.mxu0 0.0
    %1003 = vmatpush1.msra.mxu0 0.0
    %1004 = vmatprep.subr.mxu0 0.0
    %1005 = vmatpush1.msra.mxu0 0.0
    %1006 = vmatprep.subr.mxu0 0.0
    %1007 = vmatpush1.msra.mxu0 0.0
    %1008 = vmatprep.subr.mxu0 0.0
    %1009 = vmatpush1.msra.mxu0 0.0
    %1010 = vmatprep.subr.mxu0 0.0
    %1011 = vmatpush1.msra.mxu0 0.0
    %1012 = vmatprep.subr.mxu0 0.0
    %1013 = vmatpush1.msra.mxu0 0.0
    %1014 = vmatprep.subr.mxu0 0.0
    %1015 = vmatpush1.msra.mxu0 0.0
    %1016 = vmatprep.subr.mxu0 0.0
    %1017 = vmatpush1.msra.mxu0 0.0
    %1018 = vmatprep.subr.mxu0 0.0
    %1019 = vmatpush1.msra.mxu0 0.0
    %1020 = vmatprep.subr.mxu0 0.0
    %1021 = vmatpush1.msra.mxu0 0.0
    %1022 = vmatprep.subr.mxu0 0.0
    %1023 = vmatpush1.msra.mxu0 0.0
    %1024 = vmatprep.subr.mxu0 0.0
    %1025 = vmatpush1.msra.mxu0 0.0
    %1026 = vmatprep.subr.mxu0 0.0
    %1027 = vmatpush1.msra.mxu0 0.0
    %1028 = vmatprep.subr.mxu0 0.0
    %1029 = vmatpush1.msra.mxu0 0.0
    %1030 = vmatprep.subr.mxu0 0.0
    %1031 = vmatpush1.msra.mxu0 0.0
    %1032 = vmatprep.mubr.f32.mxu0 0.0
    %1033 = vmatmul.mubr.f32.gmra.mrb[0].mxu0 %v953
    %v1034 = vpop.f32.mrb[0].mxu0
    %v1035 = vadd.f32 %v934, %v1034
    %v1036 = vpop.f32.mrb[0].mxu0
    %1037 = vmatprep.mubr.f32.mxu0 0.0
    %1038 = vmatmul.mubr.f32.gmra.mrb[0].mxu0 %v956
    %v1039 = vpop.f32.mrb[0].mxu0
    %v1040 = vadd.f32 %v939, %v1039
    %v1041 = vpop.f32.mrb[0].mxu0
    %1042 = vmatprep.mubr.f32.mxu0 0.0
    %1043 = vmatmul.mubr.f32.gmra.mrb[0].mxu0 %v959
    %v1044 = vpop.f32.mrb[0].mxu0
    %v1045 = vadd.f32 %v944, %v1044
    %v1046 = vpop.f32.mrb[0].mxu0
    %1047 = vmatprep.mubr.f32.mxu0 0.0
    %1048 = vmatmul.mubr.f32.gmra.mrb[0].mxu0 %v962
    %v1049 = vpop.f32.mrb[0].mxu0
    %v1050 = vadd.f32 %v949, %v1049
    %v1051 = vpop.f32.mrb[0].mxu0
    %1052 = vdwg.mxu0
    %v1053 = vxor.u32 %v1035, 2147483648
    %v1054 = vxor.u32 %v1040, 2147483648
    %v1055 = vxor.u32 %v1045, 2147483648
    %v1056 = vxor.u32 %v1050, 2147483648
    %v1057 = vmul.f32 %v1053, 1.442695
    %v1058 = vpow.pop %v1057
    %v1059 = vmul.f32 %v1054, 1.442695
    %v1060 = vpow.pop %v1059
    %v1061 = vmul.f32 %v1055, 1.442695
    %v1062 = vpow.pop %v1061
    %v1063 = vmul.f32 %v1056, 1.442695
    %v1064 = vpow.pop %v1063
    %v1065 = vadd.f32 %v1058, 1.0
    %v1066 = vadd.f32 %v1060, 1.0
    %v1067 = vadd.f32 %v1062, 1.0
    %v1068 = vadd.f32 %v1064, 1.0
    %v1069 = vrcp.pop %v1065
    %v1070 = vmul.f32 1.0, %v1069
    %v1071 = vrcp.pop %v1066
    %v1072 = vmul.f32 1.0, %v1071
    %v1073 = vrcp.pop %v1067
    %v1074 = vmul.f32 1.0, %v1073
    %v1075 = vrcp.pop %v1068
    %v1076 = vmul.f32 1.0, %v1075
    %1078 = vset.pattern.permute.xlu0 0
    %1079 = vperm.xlu0 %1078, %v1070
    %v1080 = vpop.permute.xlu0 %1079
    %1083 = vset.pattern.permute.xlu0 0
    %1084 = vperm.xlu0 %1083, %v1072
    %v1085 = vpop.permute.xlu0 %1084
    %1088 = vset.pattern.permute.xlu0 0
    %1089 = vperm.xlu0 %1088, %v1074
    %v1090 = vpop.permute.xlu0 %1089
    %1093 = vset.pattern.permute.xlu0 0
    %1094 = vperm.xlu0 %1093, %v1076
    %v1095 = vpop.permute.xlu0 %1094
    %v1097 = vmul.f32 %v672, %v1080
    %v1098 = vmul.f32 %v674, %v1085
    %v1099 = vmul.f32 %v676, %v1090
    %v1100 = vmul.f32 %v678, %v1095
    %v1101 = vadd.f32 %v1097, %v788
    %v1102 = vadd.f32 %v1098, %v794
    %v1103 = vadd.f32 %v1099, %v800
    %v1104 = vadd.f32 %v1100, %v806
    %v1105 = vmax.f32 %v1101, 0.0
    %v1106 = vmax.f32 %v1102, 0.0
    %v1107 = vmax.f32 %v1103, 0.0
    %v1108 = vmax.f32 %v1104, 0.0
    %1109 = vst [vmem:[#allocation2] sm:$0xff] %v1105
    %1110 = vst [vmem:[#allocation2 + $0x8] sm:$0xff] %v1106
    %1111 = vst [vmem:[#allocation2 + $0x10] sm:$0xff] %v1107
    %1112 = vst [vmem:[#allocation2 + $0x18] sm:$0xff] %v1108
    %1113 = vset.pattern.permute.xlu0 1
    %1114 = vperm.xlu0 %1113, %v1070
    %v1115 = vpop.permute.xlu0 %1114
    %1117 = vset.pattern.permute.xlu0 1
    %1118 = vperm.xlu0 %1117, %v1072
    %v1119 = vpop.permute.xlu0 %1118
    %1121 = vset.pattern.permute.xlu0 1
    %1122 = vperm.xlu0 %1121, %v1074
    %v1123 = vpop.permute.xlu0 %1122
    %1125 = vset.pattern.permute.xlu0 1
    %1126 = vperm.xlu0 %1125, %v1076
    %v1127 = vpop.permute.xlu0 %1126
    %v1129 = vmul.f32 %v673, %v1115
    %v1130 = vmul.f32 %v675, %v1119
    %v1131 = vmul.f32 %v677, %v1123
    %v1132 = vmul.f32 %v679, %v1127
    %v1133 = vadd.f32 %v1129, %v790
    %v1134 = vadd.f32 %v1130, %v796
    %v1135 = vadd.f32 %v1131, %v802
    %v1136 = vadd.f32 %v1132, %v808
    %v1137 = vmax.f32 %v1133, 0.0
    %v1138 = vmax.f32 %v1134, 0.0
    %v1139 = vmax.f32 %v1135, 0.0
    %v1140 = vmax.f32 %v1136, 0.0
    %s1141 = scalar_lea.vmem [#allocation2], 32
    %1142 = vst [vmem:[%s1141] sm:$0xff] %v1137
    %1143 = vst [vmem:[%s1141 + $0x8] sm:$0xff] %v1138
    %1144 = vst [vmem:[%s1141 + $0x10] sm:$0xff] %v1139
    %1145 = vst [vmem:[%s1141 + $0x18] sm:$0xff] %v1140
    // Predicated region
    $region50: #{tpu_custom_call.1} parent=1 // pred_check
      _
    $region51: #{tpu_custom_call.1} parent=1 // pred_check_branch
      %1147 = sbr.rel (0) target = $region53
    $region52: #{tpu_custom_call.1} parent=1 // pred_region
      %s1149 = ssub.s32 1024, 1024
      %1150 = vsyncadd [#allocation3], %s1149
      %s1151 = sshll.u32 [#allocation2], 4
      %s1152 = int_to_ptr.vmem [resolvable:$true] %s1151
      %1157 = dma.vmem_to_hbm [thread:$0]  %s1152, 1024, %s12, [#allocation3], 128, 128, 8
    $region53: #{tpu_custom_call.1} parent=1 // pred_fallthru
      _
    // Predicated region
    $region54: #{tpu_custom_call.1} parent=1 // pred_check
      _
    $region55: #{tpu_custom_call.1} parent=1 // pred_check_branch
      %1159 = sbr.rel (0) target = $region57
    $region56: #{tpu_custom_call.1} parent=1 // pred_region
      %1160 = dma.done [#allocation3], 1024
    $region57: #{tpu_custom_call.1} parent=1 // pred_fallthru
      _
    %1161 = vsyncpa [#allocation3], 1

// kernel: tpu_custom_call.1
$region0: #{tpu_custom_call.1}
  #allocation0 [shape = 'u32[]', space=smem, size = 0x4, offset = 0x4, fixed_abs, tag = 'smem constant byte address 0x4 - core index']
  #allocation1 [shape = 'u32[144,128]{1,0:T(1,128)}', space=vmem, size = 0x12000, scoped, tag = 'internal scratch']
  %s0 = inlined_call_operand.vmem [shape: f32[2,16,256], index: 0, kind: input, shape index: {}]
  %s1 = inlined_call_operand.vmem [shape: s32[1,256], index: 1, kind: input, shape index: {}]
  %s2 = inlined_call_operand.vmem [shape: f32[32,48], index: 2, kind: input, shape index: {}]
  %s3 = inlined_call_operand.vmem [shape: f32[32,1], index: 3, kind: input, shape index: {}]
  %s4 = inlined_call_operand.vmem [shape: f32[3,32,32], index: 4, kind: input, shape index: {}]
  %s5 = inlined_call_operand.vmem [shape: f32[32,1], index: 5, kind: input, shape index: {}]
  %s6 = inlined_call_operand.vmem [shape: f32[2,32], index: 6, kind: input, shape index: {}]
  %s7 = inlined_call_operand.vmem [shape: f32[2,1], index: 7, kind: input, shape index: {}]
  %s8 = inlined_call_operand.vmem [shape: f32[32,2], index: 8, kind: input, shape index: {}]
  %s9 = inlined_call_operand.vmem [shape: f32[32,1], index: 9, kind: input, shape index: {}]
  %s10 = inlined_call_operand.vmem [shape: f32[32,16], index: 10, kind: input, shape index: {}]
  %s11 = inlined_call_operand.vmem [shape: f32[32,1], index: 11, kind: input, shape index: {}]
  %s12 = inlined_call_operand.hbm [shape: f32[2,32,128], index: 12, kind: output, shape index: {}]
  %s13 = sld [smem:[#allocation0]]
  $region58: #{tpu_custom_call.1} parent=0
    _
  %s15 = ssub.s32 1, %s13
  %s16 = scalar_select 0, %s15, %s13
  $region1: #{tpu_custom_call.1} parent=0
    #allocation2 [shape = 'u8[32768]{0}', space=vmem, size = 0x8000, scoped, tag = 'output window, operand 0, single buffered']
    #allocation3 [shape = 's32[1]{0}', space=sflag, size = 0x4, scoped, tag = 'scoped memory for tpu_custom_call.1']
    %17 = vsyncpa [#allocation3], 0
    // Predicated region
    $region2: #{tpu_custom_call.1} parent=1 // pred_check
      _
    $region3: #{tpu_custom_call.1} parent=1 // pred_check_branch
      %19 = sbr.rel (0) target = $region5
    $region4: #{tpu_custom_call.1} parent=1 // pred_region
      _
    $region5: #{tpu_custom_call.1} parent=1 // pred_fallthru
      _
    // Predicated region
    $region6: #{tpu_custom_call.1} parent=1 // pred_check
      _
    $region7: #{tpu_custom_call.1} parent=1 // pred_check_branch
      %21 = sbr.rel (0) target = $region9
    $region8: #{tpu_custom_call.1} parent=1 // pred_region
      _
    $region9: #{tpu_custom_call.1} parent=1 // pred_fallthru
      _
    // Predicated region
    $region10: #{tpu_custom_call.1} parent=1 // pred_check
      _
    $region11: #{tpu_custom_call.1} parent=1 // pred_check_branch
      %23 = sbr.rel (0) target = $region13
    $region12: #{tpu_custom_call.1} parent=1 // pred_region
      _
    $region13: #{tpu_custom_call.1} parent=1 // pred_fallthru
      _
    // Predicated region
    $region14: #{tpu_custom_call.1} parent=1 // pred_check
      _
    $region15: #{tpu_custom_call.1} parent=1 // pred_check_branch
      %25 = sbr.rel (0) target = $region17
    $region16: #{tpu_custom_call.1} parent=1 // pred_region
      _
    $region17: #{tpu_custom_call.1} parent=1 // pred_fallthru
      _
    // Predicated region
    $region18: #{tpu_custom_call.1} parent=1 // pred_check
      _
    $region19: #{tpu_custom_call.1} parent=1 // pred_check_branch
      %27 = sbr.rel (0) target = $region21
    $region20: #{tpu_custom_call.1} parent=1 // pred_region
      _
    $region21: #{tpu_custom_call.1} parent=1 // pred_fallthru
      _
    // Predicated region
    $region22: #{tpu_custom_call.1} parent=1 // pred_check
      _
    $region23: #{tpu_custom_call.1} parent=1 // pred_check_branch
      %29 = sbr.rel (0) target = $region25
    $region24: #{tpu_custom_call.1} parent=1 // pred_region
      _
    $region25: #{tpu_custom_call.1} parent=1 // pred_fallthru
      _
    // Predicated region
    $region26: #{tpu_custom_call.1} parent=1 // pred_check
      _
    $region27: #{tpu_custom_call.1} parent=1 // pred_check_branch
      %31 = sbr.rel (0) target = $region29
    $region28: #{tpu_custom_call.1} parent=1 // pred_region
      _
    $region29: #{tpu_custom_call.1} parent=1 // pred_fallthru
      _
    // Predicated region
    $region30: #{tpu_custom_call.1} parent=1 // pred_check
      _
    $region31: #{tpu_custom_call.1} parent=1 // pred_check_branch
      %33 = sbr.rel (0) target = $region33
    $region32: #{tpu_custom_call.1} parent=1 // pred_region
      _
    $region33: #{tpu_custom_call.1} parent=1 // pred_fallthru
      _
    // Predicated region
    $region34: #{tpu_custom_call.1} parent=1 // pred_check
      _
    $region35: #{tpu_custom_call.1} parent=1 // pred_check_branch
      %35 = sbr.rel (0) target = $region37
    $region36: #{tpu_custom_call.1} parent=1 // pred_region
      _
    $region37: #{tpu_custom_call.1} parent=1 // pred_fallthru
      _
    // Predicated region
    $region38: #{tpu_custom_call.1} parent=1 // pred_check
      _
    $region39: #{tpu_custom_call.1} parent=1 // pred_check_branch
      %37 = sbr.rel (0) target = $region41
    $region40: #{tpu_custom_call.1} parent=1 // pred_region
      _
    $region41: #{tpu_custom_call.1} parent=1 // pred_fallthru
      _
    // Predicated region
    $region42: #{tpu_custom_call.1} parent=1 // pred_check
      _
    $region43: #{tpu_custom_call.1} parent=1 // pred_check_branch
      %39 = sbr.rel (0) target = $region45
    $region44: #{tpu_custom_call.1} parent=1 // pred_region
      _
    $region45: #{tpu_custom_call.1} parent=1 // pred_fallthru
      _
    // Predicated region
    $region46: #{tpu_custom_call.1} parent=1 // pred_check
      _
    $region47: #{tpu_custom_call.1} parent=1 // pred_check_branch
      %41 = sbr.rel (0) target = $region49
    $region48: #{tpu_custom_call.1} parent=1 // pred_region
      _
    $region49: #{tpu_custom_call.1} parent=1 // pred_fallthru
      _
    %v42 = vld [vmem:[%s0] sm:$0xff]
    %v43 = vld [vmem:[%s0 + $0x8] sm:$0xff]
    %v44 = vld [vmem:[%s0 + $0x10] sm:$0xff]
    %v45 = vld [vmem:[%s0 + $0x18] sm:$0xff]
    %s46 = scalar_lea.vmem %s0, 32
    %v47 = vld [vmem:[%s46] sm:$0xff]
    %v48 = vld [vmem:[%s46 + $0x8] sm:$0xff]
    %v49 = vld [vmem:[%s46 + $0x10] sm:$0xff]
    %v50 = vld [vmem:[%s46 + $0x18] sm:$0xff]
    %51 = vrot.lane.b32.xlu0 %v42, 127
    %v52 = vpop.permute.xlu0 %51
    %53 = vrot.lane.b32.xlu0 %v44, 127
    %v54 = vpop.permute.xlu0 %53
    %55 = vrot.lane.b32.xlu0 %v43, 127
    %v56 = vpop.permute.xlu0 %55
    %57 = vrot.lane.b32.xlu0 %v45, 127
    %v58 = vpop.permute.xlu0 %57
    %v59 = vlaneseq
    %v60 = vand.u32 %v59, 127
    %vm61 = vcmp.lt.s32.totalorder %v60, 127
    %v62 = vsel %vm61, %v52, %v56
    %v63 = vsel %vm61, %v54, %v58
    %v64 = vsel %vm61, %v56, %v52
    %v65 = vsel %vm61, %v58, %v54
    %v66 = vld [vmem:[%s2] sm:$0xff]
    %v67 = vld [vmem:[%s2 + $0x8] sm:$0xff]
    %v68 = vld [vmem:[%s2 + $0x10] sm:$0xff]
    %v69 = vld [vmem:[%s2 + $0x18] sm:$0xff]
    %v70 = vld [vmem:[%s3] sm:$0xff]
    %v71 = vld [vmem:[%s3 + $0x8] sm:$0xff]
    %v72 = vld [vmem:[%s3 + $0x10] sm:$0xff]
    %v73 = vld [vmem:[%s3 + $0x18] sm:$0xff]
    %75 = vset.pattern.permute.xlu0 0
    %76 = vperm.xlu0 %75, %v70
    %v77 = vpop.permute.xlu0 %76
    %80 = vset.pattern.permute.xlu0 0
    %81 = vperm.xlu0 %80, %v71
    %v82 = vpop.permute.xlu0 %81
    %85 = vset.pattern.permute.xlu0 0
    %86 = vperm.xlu0 %85, %v72
    %v87 = vpop.permute.xlu0 %86
    %90 = vset.pattern.permute.xlu0 0
    %91 = vperm.xlu0 %90, %v73
    %v92 = vpop.permute.xlu0 %91
    %vm94 = vcmask 392192
    %v96 = vsel %vm94, %v66, 0
    %v99 = vsel %vm94, %v67, 0
    %v102 = vsel %vm94, %v68, 0
    %v105 = vsel %vm94, %v69, 0
    %107 = vmatprep.subr.mxu0 %v43
    %108 = vmatpush1.msra.mxu0 %v42
    %109 = vmatprep.subr.mxu0 %v45
    %110 = vmatpush1.msra.mxu0 %v44
    %111 = vmatprep.subr.mxu0 %v48
    %112 = vmatpush1.msra.mxu0 %v47
    %113 = vmatprep.subr.mxu0 %v50
    %114 = vmatpush1.msra.mxu0 %v49
    %115 = vmatprep.subr.mxu0 %v64
    %116 = vmatpush1.msra.mxu0 %v62
    %117 = vmatprep.subr.mxu0 %v65
    %118 = vmatpush1.msra.mxu0 %v63
    %119 = vmatprep.subr.mxu0 0.0
    %120 = vmatpush1.msra.mxu0 0.0
    %121 = vmatprep.subr.mxu0 0.0
    %122 = vmatpush1.msra.mxu0 0.0
    %123 = vmatprep.subr.mxu0 0.0
    %124 = vmatpush1.msra.mxu0 0.0
    %125 = vmatprep.subr.mxu0 0.0
    %126 = vmatpush1.msra.mxu0 0.0
    %127 = vmatprep.subr.mxu0 0.0
    %128 = vmatpush1.msra.mxu0 0.0
    %129 = vmatprep.subr.mxu0 0.0
    %130 = vmatpush1.msra.mxu0 0.0
    %131 = vmatprep.subr.mxu0 0.0
    %132 = vmatpush1.msra.mxu0 0.0
    %133 = vmatprep.subr.mxu0 0.0
    %134 = vmatpush1.msra.mxu0 0.0
    %135 = vmatprep.subr.mxu0 0.0
    %136 = vmatpush1.msra.mxu0 0.0
    %137 = vmatprep.subr.mxu0 0.0
    %138 = vmatpush1.msra.mxu0 0.0
    %139 = vmatprep.subr.mxu0 0.0
    %140 = vmatpush1.msra.mxu0 0.0
    %141 = vmatprep.subr.mxu0 0.0
    %142 = vmatpush1.msra.mxu0 0.0
    %143 = vmatprep.subr.mxu0 0.0
    %144 = vmatpush1.msra.mxu0 0.0
    %145 = vmatprep.subr.mxu0 0.0
    %146 = vmatpush1.msra.mxu0 0.0
    %147 = vmatprep.subr.mxu0 0.0
    %148 = vmatpush1.msra.mxu0 0.0
    %149 = vmatprep.subr.mxu0 0.0
    %150 = vmatpush1.msra.mxu0 0.0
    %151 = vmatprep.subr.mxu0 0.0
    %152 = vmatpush1.msra.mxu0 0.0
    %153 = vmatprep.subr.mxu0 0.0
    %154 = vmatpush1.msra.mxu0 0.0
    %155 = vmatprep.subr.mxu0 0.0
    %156 = vmatpush1.msra.mxu0 0.0
    %157 = vmatprep.subr.mxu0 0.0
    %158 = vmatpush1.msra.mxu0 0.0
    %159 = vmatprep.subr.mxu0 0.0
    %160 = vmatpush1.msra.mxu0 0.0
    %161 = vmatprep.subr.mxu0 0.0
    %162 = vmatpush1.msra.mxu0 0.0
    %163 = vmatprep.subr.mxu0 0.0
    %164 = vmatpush1.msra.mxu0 0.0
    %165 = vmatprep.subr.mxu0 0.0
    %166 = vmatpush1.msra.mxu0 0.0
    %167 = vmatprep.subr.mxu0 0.0
    %168 = vmatpush1.msra.mxu0 0.0
    %169 = vmatprep.subr.mxu0 0.0
    %170 = vmatpush1.msra.mxu0 0.0
    %171 = vmatprep.mubr.f32.mxu0 0.0
    %172 = vmatmul.mubr.f32.gmra.mrb[0].mxu0 %v96
    %v173 = vpop.f32.mrb[0].mxu0
    %v174 = vadd.f32 %v77, %v173
    %v175 = vpop.f32.mrb[0].mxu0
    %v176 = vadd.f32 %v77, %v175
    %177 = vmatprep.mubr.f32.mxu0 0.0
    %178 = vmatmul.mubr.f32.gmra.mrb[0].mxu0 %v99
    %v179 = vpop.f32.mrb[0].mxu0
    %v180 = vadd.f32 %v82, %v179
    %v181 = vpop.f32.mrb[0].mxu0
    %v182 = vadd.f32 %v82, %v181
    %183 = vmatprep.mubr.f32.mxu0 0.0
    %184 = vmatmul.mubr.f32.gmra.mrb[0].mxu0 %v102
    %v185 = vpop.f32.mrb[0].mxu0
    %v186 = vadd.f32 %v87, %v185
    %v187 = vpop.f32.mrb[0].mxu0
    %v188 = vadd.f32 %v87, %v187
    %189 = vmatprep.mubr.f32.mxu0 0.0
    %190 = vmatmul.mubr.f32.gmra.mrb[0].mxu0 %v105
    %v191 = vpop.f32.mrb[0].mxu0
    %v192 = vadd.f32 %v92, %v191
    %v193 = vpop.f32.mrb[0].mxu0
    %v194 = vadd.f32 %v92, %v193
    %195 = vdwg.mxu0
    %v196 = vmax.f32 %v174, 0.0
    %v197 = vmax.f32 %v176, 0.0
    %v198 = vmax.f32 %v180, 0.0
    %v199 = vmax.f32 %v182, 0.0
    %v200 = vmax.f32 %v186, 0.0
    %v201 = vmax.f32 %v188, 0.0
    %v202 = vmax.f32 %v192, 0.0
    %v203 = vmax.f32 %v194, 0.0
    %v204 = vld [vmem:[%s1] sm:$0x3]
    %v205 = vadd.s32 %v204, 4294967295
    %vm206 = vcmp.ge.s32.totalorder %v205, 0
    %vm207 = vcmp.lt.s32.totalorder %v205, 8
    %vm208 = vmand %vm206, %vm207
    %209 = vrot.lane.b32.xlu0 %v196, 1
    %v210 = vpop.permute.xlu0 %209
    %211 = vrot.lane.b32.xlu0 %v198, 1
    %v212 = vpop.permute.xlu0 %211
    %213 = vrot.lane.b32.xlu0 %v200, 1
    %v214 = vpop.permute.xlu0 %213
    %215 = vrot.lane.b32.xlu0 %v202, 1
    %v216 = vpop.permute.xlu0 %215
    %217 = vrot.lane.b32.xlu0 %v197, 1
    %v218 = vpop.permute.xlu0 %217
    %219 = vrot.lane.b32.xlu0 %v199, 1
    %v220 = vpop.permute.xlu0 %219
    %221 = vrot.lane.b32.xlu0 %v201, 1
    %v222 = vpop.permute.xlu0 %221
    %223 = vrot.lane.b32.xlu0 %v203, 1
    %v224 = vpop.permute.xlu0 %223
    %vm225 = vcmp.lt.s32.totalorder %v60, 1
    %v226 = vsel %vm225, %v210, %v218
    %v227 = vsel %vm225, %v212, %v220
    %v228 = vsel %vm225, %v214, %v222
    %v229 = vsel %vm225, %v216, %v224
    %v230 = vsel %vm225, %v218, %v210
    %v231 = vsel %vm225, %v220, %v212
    %v232 = vsel %vm225, %v222, %v214
    %v233 = vsel %vm225, %v224, %v216
    %v234 = vsel %vm208, 1, 0
    %v235 = vlaneseq
    %v236 = vshrl.u32 %v235, 7
    %v237 = vsub.s32 0, %v236
    %v238 = vrot.slane %v234, %v237
    %v239 = vlaneseq
    %v240 = vshrl.u32 %v239, 7
    %v241 = vsub.s32 1, %v240
    %v242 = vrot.slane %v234, %v241
    %vm243 = vcmp.eq.s32.totalorder %v238, 1
    %vm244 = vcmp.eq.s32.totalorder %v242, 1
    %v245 = vsel %vm243, %v230, 0.0
    %v246 = vsel %vm244, %v226, 0.0
    %v247 = vsel %vm243, %v231, 0.0
    %v248 = vsel %vm244, %v227, 0.0
    %v249 = vsel %vm243, %v232, 0.0
    %v250 = vsel %vm244, %v228, 0.0
    %v251 = vsel %vm243, %v233, 0.0
    %v252 = vsel %vm244, %v229, 0.0
    %v253 = vld [vmem:[%s4] sm:$0xff]
    %v254 = vld [vmem:[%s4 + $0x8] sm:$0xff]
    %v255 = vld [vmem:[%s4 + $0x10] sm:$0xff]
    %v256 = vld [vmem:[%s4 + $0x18] sm:$0xff]
    %vm257 = vcmp.ge.s32.totalorder %v204, 0
    %vm258 = vcmp.lt.s32.totalorder %v204, 8
    %vm259 = vmand %vm257, %vm258
    %v260 = vsel %vm259, 1, 0
    %v261 = vlaneseq
    %v262 = vshrl.u32 %v261, 7
    %v263 = vsub.s32 0, %v262
    %v264 = vrot.slane %v260, %v263
    %v265 = vlaneseq
    %v266 = vshrl.u32 %v265, 7
    %v267 = vsub.s32 1, %v266
    %v268 = vrot.slane %v260, %v267
    %vm269 = vcmp.eq.s32.totalorder %v264, 1
    %vm270 = vcmp.eq.s32.totalorder %v268, 1
    %v271 = vsel %vm269, %v196, 0.0
    %v272 = vsel %vm270, %v197, 0.0
    %v273 = vsel %vm269, %v198, 0.0
    %v274 = vsel %vm270, %v199, 0.0
    %v275 = vsel %vm269, %v200, 0.0
    %v276 = vsel %vm270, %v201, 0.0
    %v277 = vsel %vm269, %v202, 0.0
    %v278 = vsel %vm270, %v203, 0.0
    %s279 = scalar_lea.vmem %s4, 32
    %v280 = vld [vmem:[%s279] sm:$0xff]
    %v281 = vld [vmem:[%s279 + $0x8] sm:$0xff]
    %v282 = vld [vmem:[%s279 + $0x10] sm:$0xff]
    %v283 = vld [vmem:[%s279 + $0x18] sm:$0xff]
    %vm284 = vcmask 261120
    %v286 = vsel %vm284, %v280, 0
    %v289 = vsel %vm284, %v281, 0
    %v292 = vsel %vm284, %v282, 0
    %v295 = vsel %vm284, %v283, 0
    %297 = vmatprep.subr.mxu0 %v272
    %298 = vmatpush1.msra.mxu0 %v271
    %299 = vmatprep.subr.mxu0 %v274
    %300 = vmatpush1.msra.mxu0 %v273
    %301 = vmatprep.subr.mxu0 %v276
    %302 = vmatpush1.msra.mxu0 %v275
    %303 = vmatprep.subr.mxu0 %v278
    %304 = vmatpush1.msra.mxu0 %v277
    %305 = vmatprep.subr.mxu0 0.0
    %306 = vmatpush1.msra.mxu0 0.0
    %307 = vmatprep.subr.mxu0 0.0
    %308 = vmatpush1.msra.mxu0 0.0
    %309 = vmatprep.subr.mxu0 0.0
    %310 = vmatpush1.msra.mxu0 0.0
    %311 = vmatprep.subr.mxu0 0.0
    %312 = vmatpush1.msra.mxu0 0.0
    %313 = vmatprep.subr.mxu0 0.0
    %314 = vmatpush1.msra.mxu0 0.0
    %315 = vmatprep.subr.mxu0 0.0
    %316 = vmatpush1.msra.mxu0 0.0
    %317 = vmatprep.subr.mxu0 0.0
    %318 = vmatpush1.msra.mxu0 0.0
    %319 = vmatprep.subr.mxu0 0.0
    %320 = vmatpush1.msra.mxu0 0.0
    %321 = vmatprep.subr.mxu0 0.0
    %322 = vmatpush1.msra.mxu0 0.0
    %323 = vmatprep.subr.mxu0 0.0
    %324 = vmatpush1.msra.mxu0 0.0
    %325 = vmatprep.subr.mxu0 0.0
    %326 = vmatpush1.msra.mxu0 0.0
    %327 = vmatprep.subr.mxu0 0.0
    %328 = vmatpush1.msra.mxu0 0.0
    %329 = vmatprep.subr.mxu0 0.0
    %330 = vmatpush1.msra.mxu0 0.0
    %331 = vmatprep.subr.mxu0 0.0
    %332 = vmatpush1.msra.mxu0 0.0
    %333 = vmatprep.subr.mxu0 0.0
    %334 = vmatpush1.msra.mxu0 0.0
    %335 = vmatprep.subr.mxu0 0.0
    %336 = vmatpush1.msra.mxu0 0.0
    %337 = vmatprep.subr.mxu0 0.0
    %338 = vmatpush1.msra.mxu0 0.0
    %339 = vmatprep.subr.mxu0 0.0
    %340 = vmatpush1.msra.mxu0 0.0
    %341 = vmatprep.subr.mxu0 0.0
    %342 = vmatpush1.msra.mxu0 0.0
    %343 = vmatprep.subr.mxu0 0.0
    %344 = vmatpush1.msra.mxu0 0.0
    %345 = vmatprep.subr.mxu0 0.0
    %346 = vmatpush1.msra.mxu0 0.0
    %347 = vmatprep.subr.mxu0 0.0
    %348 = vmatpush1.msra.mxu0 0.0
    %349 = vmatprep.subr.mxu0 0.0
    %350 = vmatpush1.msra.mxu0 0.0
    %351 = vmatprep.subr.mxu0 0.0
    %352 = vmatpush1.msra.mxu0 0.0
    %353 = vmatprep.subr.mxu0 0.0
    %354 = vmatpush1.msra.mxu0 0.0
    %355 = vmatprep.subr.mxu0 0.0
    %356 = vmatpush1.msra.mxu0 0.0
    %357 = vmatprep.subr.mxu0 0.0
    %358 = vmatpush1.msra.mxu0 0.0
    %359 = vmatprep.subr.mxu0 0.0
    %360 = vmatpush1.msra.mxu0 0.0
    %361 = vmatprep.mubr.f32.mxu0 0.0
    %362 = vmatmul.mubr.f32.gmra.mrb[0].mxu0 %v286
    %v363 = vpop.f32.mrb[0].mxu0
    %v364 = vadd.f32 0.0, %v363
    %v365 = vpop.f32.mrb[0].mxu0
    %v366 = vadd.f32 0.0, %v365
    %367 = vmatprep.mubr.f32.mxu0 0.0
    %368 = vmatmul.mubr.f32.gmra.mrb[0].mxu0 %v289
    %v369 = vpop.f32.mrb[0].mxu0
    %v370 = vadd.f32 0.0, %v369
    %v371 = vpop.f32.mrb[0].mxu0
    %v372 = vadd.f32 0.0, %v371
    %373 = vmatprep.mubr.f32.mxu0 0.0
    %374 = vmatmul.mubr.f32.gmra.mrb[0].mxu0 %v292
    %v375 = vpop.f32.mrb[0].mxu0
    %v376 = vadd.f32 0.0, %v375
    %v377 = vpop.f32.mrb[0].mxu0
    %v378 = vadd.f32 0.0, %v377
    %379 = vmatprep.mubr.f32.mxu0 0.0
    %380 = vmatmul.mubr.f32.gmra.mrb[0].mxu0 %v295
    %v381 = vpop.f32.mrb[0].mxu0
    %v382 = vadd.f32 0.0, %v381
    %v383 = vpop.f32.mrb[0].mxu0
    %v384 = vadd.f32 0.0, %v383
    %385 = vdwg.mxu0
    %v387 = vsel %vm284, %v253, 0
    %v390 = vsel %vm284, %v254, 0
    %v393 = vsel %vm284, %v255, 0
    %v396 = vsel %vm284, %v256, 0
    %398 = vmatprep.subr.mxu0 %v246
    %399 = vmatpush1.msra.mxu0 %v245
    %400 = vmatprep.subr.mxu0 %v248
    %401 = vmatpush1.msra.mxu0 %v247
    %402 = vmatprep.subr.mxu0 %v250
    %403 = vmatpush1.msra.mxu0 %v249
    %404 = vmatprep.subr.mxu0 %v252
    %405 = vmatpush1.msra.mxu0 %v251
    %406 = vmatprep.subr.mxu0 0.0
    %407 = vmatpush1.msra.mxu0 0.0
    %408 = vmatprep.subr.mxu0 0.0
    %409 = vmatpush1.msra.mxu0 0.0
    %410 = vmatprep.subr.mxu0 0.0
    %411 = vmatpush1.msra.mxu0 0.0
    %412 = vmatprep.subr.mxu0 0.0
    %413 = vmatpush1.msra.mxu0 0.0
    %414 = vmatprep.subr.mxu0 0.0
    %415 = vmatpush1.msra.mxu0 0.0
    %416 = vmatprep.subr.mxu0 0.0
    %417 = vmatpush1.msra.mxu0 0.0
    %418 = vmatprep.subr.mxu0 0.0
    %419 = vmatpush1.msra.mxu0 0.0
    %420 = vmatprep.subr.mxu0 0.0
    %421 = vmatpush1.msra.mxu0 0.0
    %422 = vmatprep.subr.mxu0 0.0
    %423 = vmatpush1.msra.mxu0 0.0
    %424 = vmatprep.subr.mxu0 0.0
    %425 = vmatpush1.msra.mxu0 0.0
    %426 = vmatprep.subr.mxu0 0.0
    %427 = vmatpush1.msra.mxu0 0.0
    %428 = vmatprep.subr.mxu0 0.0
    %429 = vmatpush1.msra.mxu0 0.0
    %430 = vmatprep.subr.mxu0 0.0
    %431 = vmatpush1.msra.mxu0 0.0
    %432 = vmatprep.subr.mxu0 0.0
    %433 = vmatpush1.msra.mxu0 0.0
    %434 = vmatprep.subr.mxu0 0.0
    %435 = vmatpush1.msra.mxu0 0.0
    %436 = vmatprep.subr.mxu0 0.0
    %437 = vmatpush1.msra.mxu0 0.0
    %438 = vmatprep.subr.mxu0 0.0
    %439 = vmatpush1.msra.mxu0 0.0
    %440 = vmatprep.subr.mxu0 0.0
    %441 = vmatpush1.msra.mxu0 0.0
    %442 = vmatprep.subr.mxu0 0.0
    %443 = vmatpush1.msra.mxu0 0.0
    %444 = vmatprep.subr.mxu0 0.0
    %445 = vmatpush1.msra.mxu0 0.0
    %446 = vmatprep.subr.mxu0 0.0
    %447 = vmatpush1.msra.mxu0 0.0
    %448 = vmatprep.subr.mxu0 0.0
    %449 = vmatpush1.msra.mxu0 0.0
    %450 = vmatprep.subr.mxu0 0.0
    %451 = vmatpush1.msra.mxu0 0.0
    %452 = vmatprep.subr.mxu0 0.0
    %453 = vmatpush1.msra.mxu0 0.0
    %454 = vmatprep.subr.mxu0 0.0
    %455 = vmatpush1.msra.mxu0 0.0
    %456 = vmatprep.subr.mxu0 0.0
    %457 = vmatpush1.msra.mxu0 0.0
    %458 = vmatprep.subr.mxu0 0.0
    %459 = vmatpush1.msra.mxu0 0.0
    %460 = vmatprep.subr.mxu0 0.0
    %461 = vmatpush1.msra.mxu0 0.0
    %462 = vmatprep.mubr.f32.mxu0 0.0
    %463 = vmatmul.mubr.f32.gmra.mrb[0].mxu0 %v387
    %v464 = vpop.f32.mrb[0].mxu0
    %v465 = vadd.f32 %v364, %v464
    %v466 = vpop.f32.mrb[0].mxu0
    %v467 = vadd.f32 %v366, %v466
    %468 = vmatprep.mubr.f32.mxu0 0.0
    %469 = vmatmul.mubr.f32.gmra.mrb[0].mxu0 %v390
    %v470 = vpop.f32.mrb[0].mxu0
    %v471 = vadd.f32 %v370, %v470
    %v472 = vpop.f32.mrb[0].mxu0
    %v473 = vadd.f32 %v372, %v472
    %474 = vmatprep.mubr.f32.mxu0 0.0
    %475 = vmatmul.mubr.f32.gmra.mrb[0].mxu0 %v393
    %v476 = vpop.f32.mrb[0].mxu0
    %v477 = vadd.f32 %v376, %v476
    %v478 = vpop.f32.mrb[0].mxu0
    %v479 = vadd.f32 %v378, %v478
    %480 = vmatprep.mubr.f32.mxu0 0.0
    %481 = vmatmul.mubr.f32.gmra.mrb[0].mxu0 %v396
    %v482 = vpop.f32.mrb[0].mxu0
    %v483 = vadd.f32 %v382, %v482
    %v484 = vpop.f32.mrb[0].mxu0
    %v485 = vadd.f32 %v384, %v484
    %486 = vdwg.mxu0
    %v487 = vadd.s32 %v204, 1
    %vm488 = vcmp.ge.s32.totalorder %v487, 0
    %vm489 = vcmp.lt.s32.totalorder %v487, 8
    %vm490 = vmand %vm488, %vm489
    %491 = vrot.lane.b32.xlu0 %v196, 127
    %v492 = vpop.permute.xlu0 %491
    %493 = vrot.lane.b32.xlu0 %v198, 127
    %v494 = vpop.permute.xlu0 %493
    %495 = vrot.lane.b32.xlu0 %v200, 127
    %v496 = vpop.permute.xlu0 %495
    %497 = vrot.lane.b32.xlu0 %v202, 127
    %v498 = vpop.permute.xlu0 %497
    %499 = vrot.lane.b32.xlu0 %v197, 127
    %v500 = vpop.permute.xlu0 %499
    %501 = vrot.lane.b32.xlu0 %v199, 127
    %v502 = vpop.permute.xlu0 %501
    %503 = vrot.lane.b32.xlu0 %v201, 127
    %v504 = vpop.permute.xlu0 %503
    %505 = vrot.lane.b32.xlu0 %v203, 127
    %v506 = vpop.permute.xlu0 %505
    %v507 = vsel %vm61, %v492, %v500
    %v508 = vsel %vm61, %v494, %v502
    %v509 = vsel %vm61, %v496, %v504
    %v510 = vsel %vm61, %v498, %v506
    %v511 = vsel %vm61, %v500, %v492
    %v512 = vsel %vm61, %v502, %v494
    %v513 = vsel %vm61, %v504, %v496
    %v514 = vsel %vm61, %v506, %v498
    %v515 = vsel %vm490, 1, 0
    %v516 = vlaneseq
    %v517 = vshrl.u32 %v516, 7
    %v518 = vsub.s32 0, %v517
    %v519 = vrot.slane %v515, %v518
    %v520 = vlaneseq
    %v521 = vshrl.u32 %v520, 7
    %v522 = vsub.s32 1, %v521
    %v523 = vrot.slane %v515, %v522
    %vm524 = vcmp.eq.s32.totalorder %v519, 1
    %vm525 = vcmp.eq.s32.totalorder %v523, 1
    %v526 = vsel %vm524, %v507, 0.0
    %v527 = vsel %vm525, %v511, 0.0
    %v528 = vsel %vm524, %v508, 0.0
    %v529 = vsel %vm525, %v512, 0.0
    %v530 = vsel %vm524, %v509, 0.0
    %v531 = vsel %vm525, %v513, 0.0
    %v532 = vsel %vm524, %v510, 0.0
    %v533 = vsel %vm525, %v514, 0.0
    %s534 = scalar_lea.vmem %s4, 64
    %v535 = vld [vmem:[%s534] sm:$0xff]
    %v536 = vld [vmem:[%s534 + $0x8] sm:$0xff]
    %v537 = vld [vmem:[%s534 + $0x10] sm:$0xff]
    %v538 = vld [vmem:[%s534 + $0x18] sm:$0xff]
    %v540 = vsel %vm284, %v535, 0
    %v543 = vsel %vm284, %v536, 0
    %v546 = vsel %vm284, %v537, 0
    %v549 = vsel %vm284, %v538, 0
    %551 = vmatprep.subr.mxu0 %v527
    %552 = vmatpush1.msra.mxu0 %v526
    %553 = vmatprep.subr.mxu0 %v529
    %554 = vmatpush1.msra.mxu0 %v528
    %555 = vmatprep.subr.mxu0 %v531
    %556 = vmatpush1.msra.mxu0 %v530
    %557 = vmatprep.subr.mxu0 %v533
    %558 = vmatpush1.msra.mxu0 %v532
    %559 = vmatprep.subr.mxu0 0.0
    %560 = vmatpush1.msra.mxu0 0.0
    %561 = vmatprep.subr.mxu0 0.0
    %562 = vmatpush1.msra.mxu0 0.0
    %563 = vmatprep.subr.mxu0 0.0
    %564 = vmatpush1.msra.mxu0 0.0
    %565 = vmatprep.subr.mxu0 0.0
    %566 = vmatpush1.msra.mxu0 0.0
    %567 = vmatprep.subr.mxu0 0.0
    %568 = vmatpush1.msra.mxu0 0.0
    %569 = vmatprep.subr.mxu0 0.0
    %570 = vmatpush1.msra.mxu0 0.0
    %571 = vmatprep.subr.mxu0 0.0
    %572 = vmatpush1.msra.mxu0 0.0
    %573 = vmatprep.subr.mxu0 0.0
    %574 = vmatpush1.msra.mxu0 0.0
    %575 = vmatprep.subr.mxu0 0.0
    %576 = vmatpush1.msra.mxu0 0.0
    %577 = vmatprep.subr.mxu0 0.0
    %578 = vmatpush1.msra.mxu0 0.0
    %579 = vmatprep.subr.mxu0 0.0
    %580 = vmatpush1.msra.mxu0 0.0
    %581 = vmatprep.subr.mxu0 0.0
    %582 = vmatpush1.msra.mxu0 0.0
    %583 = vmatprep.subr.mxu0 0.0
    %584 = vmatpush1.msra.mxu0 0.0
    %585 = vmatprep.subr.mxu0 0.0
    %586 = vmatpush1.msra.mxu0 0.0
    %587 = vmatprep.subr.mxu0 0.0
    %588 = vmatpush1.msra.mxu0 0.0
    %589 = vmatprep.subr.mxu0 0.0
    %590 = vmatpush1.msra.mxu0 0.0
    %591 = vmatprep.subr.mxu0 0.0
    %592 = vmatpush1.msra.mxu0 0.0
    %593 = vmatprep.subr.mxu0 0.0
    %594 = vmatpush1.msra.mxu0 0.0
    %595 = vmatprep.subr.mxu0 0.0
    %596 = vmatpush1.msra.mxu0 0.0
    %597 = vmatprep.subr.mxu0 0.0
    %598 = vmatpush1.msra.mxu0 0.0
    %599 = vmatprep.subr.mxu0 0.0
    %600 = vmatpush1.msra.mxu0 0.0
    %601 = vmatprep.subr.mxu0 0.0
    %602 = vmatpush1.msra.mxu0 0.0
    %603 = vmatprep.subr.mxu0 0.0
    %604 = vmatpush1.msra.mxu0 0.0
    %605 = vmatprep.subr.mxu0 0.0
    %606 = vmatpush1.msra.mxu0 0.0
    %607 = vmatprep.subr.mxu0 0.0
    %608 = vmatpush1.msra.mxu0 0.0
    %609 = vmatprep.subr.mxu0 0.0
    %610 = vmatpush1.msra.mxu0 0.0
    %611 = vmatprep.subr.mxu0 0.0
    %612 = vmatpush1.msra.mxu0 0.0
    %613 = vmatprep.subr.mxu0 0.0
    %614 = vmatpush1.msra.mxu0 0.0
    %615 = vmatprep.mubr.f32.mxu0 0.0
    %616 = vmatmul.mubr.f32.gmra.mrb[0].mxu0 %v540
    %v617 = vpop.f32.mrb[0].mxu0
    %v618 = vadd.f32 0.0, %v617
    %v619 = vpop.f32.mrb[0].mxu0
    %v620 = vadd.f32 0.0, %v619
    %621 = vmatprep.mubr.f32.mxu0 0.0
    %622 = vmatmul.mubr.f32.gmra.mrb[0].mxu0 %v543
    %v623 = vpop.f32.mrb[0].mxu0
    %v624 = vadd.f32 0.0, %v623
    %v625 = vpop.f32.mrb[0].mxu0
    %v626 = vadd.f32 0.0, %v625
    %627 = vmatprep.mubr.f32.mxu0 0.0
    %628 = vmatmul.mubr.f32.gmra.mrb[0].mxu0 %v546
    %v629 = vpop.f32.mrb[0].mxu0
    %v630 = vadd.f32 0.0, %v629
    %v631 = vpop.f32.mrb[0].mxu0
    %v632 = vadd.f32 0.0, %v631
    %633 = vmatprep.mubr.f32.mxu0 0.0
    %634 = vmatmul.mubr.f32.gmra.mrb[0].mxu0 %v549
    %v635 = vpop.f32.mrb[0].mxu0
    %v636 = vadd.f32 0.0, %v635
    %v637 = vpop.f32.mrb[0].mxu0
    %v638 = vadd.f32 0.0, %v637
    %639 = vdwg.mxu0
    %v640 = vadd.f32 %v465, %v618
    %v641 = vadd.f32 %v467, %v620
    %v642 = vadd.f32 %v471, %v624
    %v643 = vadd.f32 %v473, %v626
    %v644 = vadd.f32 %v477, %v630
    %v645 = vadd.f32 %v479, %v632
    %v646 = vadd.f32 %v483, %v636
    %v647 = vadd.f32 %v485, %v638
    %v648 = vld [vmem:[%s5] sm:$0xff]
    %v649 = vld [vmem:[%s5 + $0x8] sm:$0xff]
    %v650 = vld [vmem:[%s5 + $0x10] sm:$0xff]
    %v651 = vld [vmem:[%s5 + $0x18] sm:$0xff]
    %653 = vset.pattern.permute.xlu0 0
    %654 = vperm.xlu0 %653, %v648
    %v655 = vpop.permute.xlu0 %654
    %658 = vset.pattern.permute.xlu0 0
    %659 = vperm.xlu0 %658, %v649
    %v660 = vpop.permute.xlu0 %659
    %663 = vset.pattern.permute.xlu0 0
    %664 = vperm.xlu0 %663, %v650
    %v665 = vpop.permute.xlu0 %664
    %668 = vset.pattern.permute.xlu0 0
    %669 = vperm.xlu0 %668, %v651
    %v670 = vpop.permute.xlu0 %669
    %v672 = vadd.f32 %v640, %v655
    %v673 = vadd.f32 %v641, %v655
    %v674 = vadd.f32 %v642, %v660
    %v675 = vadd.f32 %v643, %v660
    %v676 = vadd.f32 %v644, %v665
    %v677 = vadd.f32 %v645, %v665
    %v678 = vadd.f32 %v646, %v670
    %v679 = vadd.f32 %v647, %v670
    %v680 = vld [vmem:[%s10] sm:$0xff]
    %v681 = vld [vmem:[%s10 + $0x8] sm:$0xff]
    %v682 = vld [vmem:[%s10 + $0x10] sm:$0xff]
    %v683 = vld [vmem:[%s10 + $0x18] sm:$0xff]
    %v684 = vld [vmem:[%s11] sm:$0xff]
    %v685 = vld [vmem:[%s11 + $0x8] sm:$0xff]
    %v686 = vld [vmem:[%s11 + $0x10] sm:$0xff]
    %v687 = vld [vmem:[%s11 + $0x18] sm:$0xff]
    %689 = vset.pattern.permute.xlu0 0
    %690 = vperm.xlu0 %689, %v684
    %v691 = vpop.permute.xlu0 %690
    %694 = vset.pattern.permute.xlu0 0
    %695 = vperm.xlu0 %694, %v685
    %v696 = vpop.permute.xlu0 %695
    %699 = vset.pattern.permute.xlu0 0
    %700 = vperm.xlu0 %699, %v686
    %v701 = vpop.permute.xlu0 %700
    %704 = vset.pattern.permute.xlu0 0
    %705 = vperm.xlu0 %704, %v687
    %v706 = vpop.permute.xlu0 %705
    %vm708 = vcmask 130048
    %v710 = vsel %vm708, %v680, 0
    %v713 = vsel %vm708, %v681, 0
    %v716 = vsel %vm708, %v682, 0
    %v719 = vsel %vm708, %v683, 0
    %721 = vmatprep.subr.mxu0 %v48
    %722 = vmatpush1.msra.mxu0 %v47
    %723 = vmatprep.subr.mxu0 %v50
    %724 = vmatpush1.msra.mxu0 %v49
    %725 = vmatprep.subr.mxu0 0.0
    %726 = vmatpush1.msra.mxu0 0.0
    %727 = vmatprep.subr.mxu0 0.0
    %728 = vmatpush1.msra.mxu0 0.0
    %729 = vmatprep.subr.mxu0 0.0
    %730 = vmatpush1.msra.mxu0 0.0
    %731 = vmatprep.subr.mxu0 0.0
    %732 = vmatpush1.msra.mxu0 0.0
    %733 = vmatprep.subr.mxu0 0.0
    %734 = vmatpush1.msra.mxu0 0.0
    %735 = vmatprep.subr.mxu0 0.0
    %736 = vmatpush1.msra.mxu0 0.0
    %737 = vmatprep.subr.mxu0 0.0
    %738 = vmatpush1.msra.mxu0 0.0
    %739 = vmatprep.subr.mxu0 0.0
    %740 = vmatpush1.msra.mxu0 0.0
    %741 = vmatprep.subr.mxu0 0.0
    %742 = vmatpush1.msra.mxu0 0.0
    %743 = vmatprep.subr.mxu0 0.0
    %744 = vmatpush1.msra.mxu0 0.0
    %745 = vmatprep.subr.mxu0 0.0
    %746 = vmatpush1.msra.mxu0 0.0
    %747 = vmatprep.subr.mxu0 0.0
    %748 = vmatpush1.msra.mxu0 0.0
    %749 = vmatprep.subr.mxu0 0.0
    %750 = vmatpush1.msra.mxu0 0.0
    %751 = vmatprep.subr.mxu0 0.0
    %752 = vmatpush1.msra.mxu0 0.0
    %753 = vmatprep.subr.mxu0 0.0
    %754 = vmatpush1.msra.mxu0 0.0
    %755 = vmatprep.subr.mxu0 0.0
    %756 = vmatpush1.msra.mxu0 0.0
    %757 = vmatprep.subr.mxu0 0.0
    %758 = vmatpush1.msra.mxu0 0.0
    %759 = vmatprep.subr.mxu0 0.0
    %760 = vmatpush1.msra.mxu0 0.0
    %761 = vmatprep.subr.mxu0 0.0
    %762 = vmatpush1.msra.mxu0 0.0
    %763 = vmatprep.subr.mxu0 0.0
    %764 = vmatpush1.msra.mxu0 0.0
    %765 = vmatprep.subr.mxu0 0.0
    %766 = vmatpush1.msra.mxu0 0.0
    %767 = vmatprep.subr.mxu0 0.0
    %768 = vmatpush1.msra.mxu0 0.0
    %769 = vmatprep.subr.mxu0 0.0
    %770 = vmatpush1.msra.mxu0 0.0
    %771 = vmatprep.subr.mxu0 0.0
    %772 = vmatpush1.msra.mxu0 0.0
    %773 = vmatprep.subr.mxu0 0.0
    %774 = vmatpush1.msra.mxu0 0.0
    %775 = vmatprep.subr.mxu0 0.0
    %776 = vmatpush1.msra.mxu0 0.0
    %777 = vmatprep.subr.mxu0 0.0
    %778 = vmatpush1.msra.mxu0 0.0
    %779 = vmatprep.subr.mxu0 0.0
    %780 = vmatpush1.msra.mxu0 0.0
    %781 = vmatprep.subr.mxu0 0.0
    %782 = vmatpush1.msra.mxu0 0.0
    %783 = vmatprep.subr.mxu0 0.0
    %784 = vmatpush1.msra.mxu0 0.0
    %785 = vmatprep.mubr.f32.mxu0 0.0
    %786 = vmatmul.mubr.f32.gmra.mrb[0].mxu0 %v710
    %v787 = vpop.f32.mrb[0].mxu0
    %v788 = vadd.f32 %v691, %v787
    %v789 = vpop.f32.mrb[0].mxu0
    %v790 = vadd.f32 %v691, %v789
    %791 = vmatprep.mubr.f32.mxu0 0.0
    %792 = vmatmul.mubr.f32.gmra.mrb[0].mxu0 %v713
    %v793 = vpop.f32.mrb[0].mxu0
    %v794 = vadd.f32 %v696, %v793
    %v795 = vpop.f32.mrb[0].mxu0
    %v796 = vadd.f32 %v696, %v795
    %797 = vmatprep.mubr.f32.mxu0 0.0
    %798 = vmatmul.mubr.f32.gmra.mrb[0].mxu0 %v716
    %v799 = vpop.f32.mrb[0].mxu0
    %v800 = vadd.f32 %v701, %v799
    %v801 = vpop.f32.mrb[0].mxu0
    %v802 = vadd.f32 %v701, %v801
    %803 = vmatprep.mubr.f32.mxu0 0.0
    %804 = vmatmul.mubr.f32.gmra.mrb[0].mxu0 %v719
    %v805 = vpop.f32.mrb[0].mxu0
    %v806 = vadd.f32 %v706, %v805
    %v807 = vpop.f32.mrb[0].mxu0
    %v808 = vadd.f32 %v706, %v807
    %809 = vdwg.mxu0
    %vm810 = vcmp.lt.s32.totalorder %v60, 8
    %v811 = vsel %vm810, 1, 0
    %vm812 = vcmp.eq.s32.totalorder %v811, 1
    %v813 = vsel %vm812, %v672, 0.0
    %v814 = vsel %vm812, %v674, 0.0
    %v815 = vsel %vm812, %v676, 0.0
    %v816 = vsel %vm812, %v678, 0.0
    %817 = vadd.xlane.f32.xlu0 %v813
    %v818 = vpop.xlane.xlu0 %817
    %819 = vadd.xlane.f32.xlu0 %v814
    %v820 = vpop.xlane.xlu0 %819
    %821 = vadd.xlane.f32.xlu0 %v815
    %v822 = vpop.xlane.xlu0 %821
    %823 = vadd.xlane.f32.xlu0 %v816
    %v824 = vpop.xlane.xlu0 %823
    %v825 = vsel %vm812, %v673, 0.0
    %v826 = vsel %vm812, %v675, 0.0
    %v827 = vsel %vm812, %v677, 0.0
    %v828 = vsel %vm812, %v679, 0.0
    %829 = vadd.xlane.f32.xlu0 %v825
    %v830 = vpop.xlane.xlu0 %829
    %831 = vadd.xlane.f32.xlu0 %v826
    %v832 = vpop.xlane.xlu0 %831
    %833 = vadd.xlane.f32.xlu0 %v827
    %v834 = vpop.xlane.xlu0 %833
    %835 = vadd.xlane.f32.xlu0 %v828
    %v836 = vpop.xlane.xlu0 %835
    %vm837 = vcmask 7168
    %v838 = vsel %vm837, %v818, %v830
    %v839 = vsel %vm837, %v820, %v832
    %v840 = vsel %vm837, %v822, %v834
    %v841 = vsel %vm837, %v824, %v836
    %v842 = vld [vmem:[%s6] sm:$0x3]
    %v843 = vld [vmem:[%s7] sm:$0x3]
    %845 = vset.pattern.permute.xlu0 0
    %846 = vperm.xlu0 %845, %v843
    %v847 = vpop.permute.xlu0 %846
    %v850 = vsel %vm284, %v842, 0
    %852 = vmatprep.subr.mxu0 0.0
    %853 = vmatpush1.msra.mxu0 %v838
    %854 = vmatprep.subr.mxu0 0.0
    %855 = vmatpush1.msra.mxu0 %v839
    %856 = vmatprep.subr.mxu0 0.0
    %857 = vmatpush1.msra.mxu0 %v840
    %858 = vmatprep.subr.mxu0 0.0
    %859 = vmatpush1.msra.mxu0 %v841
    %860 = vmatprep.subr.mxu0 0.0
    %861 = vmatpush1.msra.mxu0 0.0
    %862 = vmatprep.subr.mxu0 0.0
    %863 = vmatpush1.msra.mxu0 0.0
    %864 = vmatprep.subr.mxu0 0.0
    %865 = vmatpush1.msra.mxu0 0.0
    %866 = vmatprep.subr.mxu0 0.0
    %867 = vmatpush1.msra.mxu0 0.0
    %868 = vmatprep.subr.mxu0 0.0
    %869 = vmatpush1.msra.mxu0 0.0
    %870 = vmatprep.subr.mxu0 0.0
    %871 = vmatpush1.msra.mxu0 0.0
    %872 = vmatprep.subr.mxu0 0.0
    %873 = vmatpush1.msra.mxu0 0.0
    %874 = vmatprep.subr.mxu0 0.0
    %875 = vmatpush1.msra.mxu0 0.0
    %876 = vmatprep.subr.mxu0 0.0
    %877 = vmatpush1.msra.mxu0 0.0
    %878 = vmatprep.subr.mxu0 0.0
    %879 = vmatpush1.msra.mxu0 0.0
    %880 = vmatprep.subr.mxu0 0.0
    %881 = vmatpush1.msra.mxu0 0.0
    %882 = vmatprep.subr.mxu0 0.0
    %883 = vmatpush1.msra.mxu0 0.0
    %884 = vmatprep.subr.mxu0 0.0
    %885 = vmatpush1.msra.mxu0 0.0
    %886 = vmatprep.subr.mxu0 0.0
    %887 = vmatpush1.msra.mxu0 0.0
    %888 = vmatprep.subr.mxu0 0.0
    %889 = vmatpush1.msra.mxu0 0.0
    %890 = vmatprep.subr.mxu0 0.0
    %891 = vmatpush1.msra.mxu0 0.0
    %892 = vmatprep.subr.mxu0 0.0
    %893 = vmatpush1.msra.mxu0 0.0
    %894 = vmatprep.subr.mxu0 0.0
    %895 = vmatpush1.msra.mxu0 0.0
    %896 = vmatprep.subr.mxu0 0.0
    %897 = vmatpush1.msra.mxu0 0.0
    %898 = vmatprep.subr.mxu0 0.0
    %899 = vmatpush1.msra.mxu0 0.0
    %900 = vmatprep.subr.mxu0 0.0
    %901 = vmatpush1.msra.mxu0 0.0
    %902 = vmatprep.subr.mxu0 0.0
    %903 = vmatpush1.msra.mxu0 0.0
    %904 = vmatprep.subr.mxu0 0.0
    %905 = vmatpush1.msra.mxu0 0.0
    %906 = vmatprep.subr.mxu0 0.0
    %907 = vmatpush1.msra.mxu0 0.0
    %908 = vmatprep.subr.mxu0 0.0
    %909 = vmatpush1.msra.mxu0 0.0
    %910 = vmatprep.subr.mxu0 0.0
    %911 = vmatpush1.msra.mxu0 0.0
    %912 = vmatprep.subr.mxu0 0.0
    %913 = vmatpush1.msra.mxu0 0.0
    %914 = vmatprep.subr.mxu0 0.0
    %915 = vmatpush1.msra.mxu0 0.0
    %916 = vmatprep.mubr.f32.mxu0 0.0
    %917 = vmatmul.mubr.f32.gmra.mrb[0].mxu0 %v850
    %v918 = vpop.f32.mrb[0].mxu0
    %v919 = vadd.f32 %v847, %v918
    %v920 = vpop.f32.mrb[0].mxu0
    %921 = vdwg.mxu0
    %v922 = vmax.f32 %v919, 0.0
    %v923 = vld [vmem:[%s8] sm:$0xff]
    %v924 = vld [vmem:[%s8 + $0x8] sm:$0xff]
    %v925 = vld [vmem:[%s8 + $0x10] sm:$0xff]
    %v926 = vld [vmem:[%s8 + $0x18] sm:$0xff]
    %v927 = vld [vmem:[%s9] sm:$0xff]
    %v928 = vld [vmem:[%s9 + $0x8] sm:$0xff]
    %v929 = vld [vmem:[%s9 + $0x10] sm:$0xff]
    %v930 = vld [vmem:[%s9 + $0x18] sm:$0xff]
    %932 = vset.pattern.permute.xlu0 0
    %933 = vperm.xlu0 %932, %v927
    %v934 = vpop.permute.xlu0 %933
    %937 = vset.pattern.permute.xlu0 0
    %938 = vperm.xlu0 %937, %v928
    %v939 = vpop.permute.xlu0 %938
    %942 = vset.pattern.permute.xlu0 0
    %943 = vperm.xlu0 %942, %v929
    %v944 = vpop.permute.xlu0 %943
    %947 = vset.pattern.permute.xlu0 0
    %948 = vperm.xlu0 %947, %v930
    %v949 = vpop.permute.xlu0 %948
    %vm951 = vcmask 15360
    %v953 = vsel %vm951, %v923, 0
    %v956 = vsel %vm951, %v924, 0
    %v959 = vsel %vm951, %v925, 0
    %v962 = vsel %vm951, %v926, 0
    %vm964 = vcmask 1041408
    %v966 = vsel %vm964, %v922, 0
    %968 = vmatprep.subr.mxu0 0.0
    %969 = vmatpush1.msra.mxu0 %v966
    %970 = vmatprep.subr.mxu0 0.0
    %971 = vmatpush1.msra.mxu0 0.0
    %972 = vmatprep.subr.mxu0 0.0
    %973 = vmatpush1.msra.mxu0 0.0
    %974 = vmatprep.subr.mxu0 0.0
    %975 = vmatpush1.msra.mxu0 0.0
    %976 = vmatprep.subr.mxu0 0.0
    %977 = vmatpush1.msra.mxu0 0.0
    %978 = vmatprep.subr.mxu0 0.0
    %979 = vmatpush1.msra.mxu0 0.0
    %980 = vmatprep.subr.mxu0 0.0
    %981 = vmatpush1.msra.mxu0 0.0
    %982 = vmatprep.subr.mxu0 0.0
    %983 = vmatpush1.msra.mxu0 0.0
    %984 = vmatprep.subr.mxu0 0.0
    %985 = vmatpush1.msra.mxu0 0.0
    %986 = vmatprep.subr.mxu0 0.0
    %987 = vmatpush1.msra.mxu0 0.0
    %988 = vmatprep.subr.mxu0 0.0
    %989 = vmatpush1.msra.mxu0 0.0
    %990 = vmatprep.subr.mxu0 0.0
    %991 = vmatpush1.msra.mxu0 0.0
    %992 = vmatprep.subr.mxu0 0.0
    %993 = vmatpush1.msra.mxu0 0.0
    %994 = vmatprep.subr.mxu0 0.0
    %995 = vmatpush1.msra.mxu0 0.0
    %996 = vmatprep.subr.mxu0 0.0
    %997 = vmatpush1.msra.mxu0 0.0
    %998 = vmatprep.subr.mxu0 0.0
    %999 = vmatpush1.msra.mxu0 0.0
    %1000 = vmatprep.subr.mxu0 0.0
    %1001 = vmatpush1.msra.mxu0 0.0
    %1002 = vmatprep.subr.mxu0 0.0
    %1003 = vmatpush1.msra.mxu0 0.0
    %1004 = vmatprep.subr.mxu0 0.0
    %1005 = vmatpush1.msra.mxu0 0.0
    %1006 = vmatprep.subr.mxu0 0.0
    %1007 = vmatpush1.msra.mxu0 0.0
    %1008 = vmatprep.subr.mxu0 0.0
    %1009 = vmatpush1.msra.mxu0 0.0
    %1010 = vmatprep.subr.mxu0 0.0
    %1011 = vmatpush1.msra.mxu0 0.0
    %1012 = vmatprep.subr.mxu0 0.0
    %1013 = vmatpush1.msra.mxu0 0.0
    %1014 = vmatprep.subr.mxu0 0.0
    %1015 = vmatpush1.msra.mxu0 0.0
    %1016 = vmatprep.subr.mxu0 0.0
    %1017 = vmatpush1.msra.mxu0 0.0
    %1018 = vmatprep.subr.mxu0 0.0
    %1019 = vmatpush1.msra.mxu0 0.0
    %1020 = vmatprep.subr.mxu0 0.0
    %1021 = vmatpush1.msra.mxu0 0.0
    %1022 = vmatprep.subr.mxu0 0.0
    %1023 = vmatpush1.msra.mxu0 0.0
    %1024 = vmatprep.subr.mxu0 0.0
    %1025 = vmatpush1.msra.mxu0 0.0
    %1026 = vmatprep.subr.mxu0 0.0
    %1027 = vmatpush1.msra.mxu0 0.0
    %1028 = vmatprep.subr.mxu0 0.0
    %1029 = vmatpush1.msra.mxu0 0.0
    %1030 = vmatprep.subr.mxu0 0.0
    %1031 = vmatpush1.msra.mxu0 0.0
    %1032 = vmatprep.mubr.f32.mxu0 0.0
    %1033 = vmatmul.mubr.f32.gmra.mrb[0].mxu0 %v953
    %v1034 = vpop.f32.mrb[0].mxu0
    %v1035 = vadd.f32 %v934, %v1034
    %v1036 = vpop.f32.mrb[0].mxu0
    %1037 = vmatprep.mubr.f32.mxu0 0.0
    %1038 = vmatmul.mubr.f32.gmra.mrb[0].mxu0 %v956
    %v1039 = vpop.f32.mrb[0].mxu0
    %v1040 = vadd.f32 %v939, %v1039
    %v1041 = vpop.f32.mrb[0].mxu0
    %1042 = vmatprep.mubr.f32.mxu0 0.0
    %1043 = vmatmul.mubr.f32.gmra.mrb[0].mxu0 %v959
    %v1044 = vpop.f32.mrb[0].mxu0
    %v1045 = vadd.f32 %v944, %v1044
    %v1046 = vpop.f32.mrb[0].mxu0
    %1047 = vmatprep.mubr.f32.mxu0 0.0
    %1048 = vmatmul.mubr.f32.gmra.mrb[0].mxu0 %v962
    %v1049 = vpop.f32.mrb[0].mxu0
    %v1050 = vadd.f32 %v949, %v1049
    %v1051 = vpop.f32.mrb[0].mxu0
    %1052 = vdwg.mxu0
    %v1053 = vxor.u32 %v1035, 2147483648
    %v1054 = vxor.u32 %v1040, 2147483648
    %v1055 = vxor.u32 %v1045, 2147483648
    %v1056 = vxor.u32 %v1050, 2147483648
    %v1057 = vmul.f32 %v1053, 1.442695
    %v1058 = vpow.pop %v1057
    %v1059 = vmul.f32 %v1054, 1.442695
    %v1060 = vpow.pop %v1059
    %v1061 = vmul.f32 %v1055, 1.442695
    %v1062 = vpow.pop %v1061
    %v1063 = vmul.f32 %v1056, 1.442695
    %v1064 = vpow.pop %v1063
    %v1065 = vadd.f32 %v1058, 1.0
    %v1066 = vadd.f32 %v1060, 1.0
    %v1067 = vadd.f32 %v1062, 1.0
    %v1068 = vadd.f32 %v1064, 1.0
    %v1069 = vrcp.pop %v1065
    %v1070 = vmul.f32 1.0, %v1069
    %v1071 = vrcp.pop %v1066
    %v1072 = vmul.f32 1.0, %v1071
    %v1073 = vrcp.pop %v1067
    %v1074 = vmul.f32 1.0, %v1073
    %v1075 = vrcp.pop %v1068
    %v1076 = vmul.f32 1.0, %v1075
    %1078 = vset.pattern.permute.xlu0 0
    %1079 = vperm.xlu0 %1078, %v1070
    %v1080 = vpop.permute.xlu0 %1079
    %1083 = vset.pattern.permute.xlu0 0
    %1084 = vperm.xlu0 %1083, %v1072
    %v1085 = vpop.permute.xlu0 %1084
    %1088 = vset.pattern.permute.xlu0 0
    %1089 = vperm.xlu0 %1088, %v1074
    %v1090 = vpop.permute.xlu0 %1089
    %1093 = vset.pattern.permute.xlu0 0
    %1094 = vperm.xlu0 %1093, %v1076
    %v1095 = vpop.permute.xlu0 %1094
    %v1097 = vmul.f32 %v672, %v1080
    %v1098 = vmul.f32 %v674, %v1085
    %v1099 = vmul.f32 %v676, %v1090
    %v1100 = vmul.f32 %v678, %v1095
    %v1101 = vadd.f32 %v1097, %v788
    %v1102 = vadd.f32 %v1098, %v794
    %v1103 = vadd.f32 %v1099, %v800
    %v1104 = vadd.f32 %v1100, %v806
    %v1105 = vmax.f32 %v1101, 0.0
    %v1106 = vmax.f32 %v1102, 0.0
    %v1107 = vmax.f32 %v1103, 0.0
    %v1108 = vmax.f32 %v1104, 0.0
    %1109 = vst [vmem:[#allocation2] sm:$0xff] %v1105
    %1110 = vst [vmem:[#allocation2 + $0x8] sm:$0xff] %v1106
    %1111 = vst [vmem:[#allocation2 + $0x10] sm:$0xff] %v1107
    %1112 = vst [vmem:[#allocation2 + $0x18] sm:$0xff] %v1108
    %1113 = vset.pattern.permute.xlu0 1
    %1114 = vperm.xlu0 %1113, %v1070
    %v1115 = vpop.permute.xlu0 %1114
    %1117 = vset.pattern.permute.xlu0 1
    %1118 = vperm.xlu0 %1117, %v1072
    %v1119 = vpop.permute.xlu0 %1118
    %1121 = vset.pattern.permute.xlu0 1
    %1122 = vperm.xlu0 %1121, %v1074
    %v1123 = vpop.permute.xlu0 %1122
    %1125 = vset.pattern.permute.xlu0 1
    %1126 = vperm.xlu0 %1125, %v1076
    %v1127 = vpop.permute.xlu0 %1126
    %v1129 = vmul.f32 %v673, %v1115
    %v1130 = vmul.f32 %v675, %v1119
    %v1131 = vmul.f32 %v677, %v1123
    %v1132 = vmul.f32 %v679, %v1127
    %v1133 = vadd.f32 %v1129, %v790
    %v1134 = vadd.f32 %v1130, %v796
    %v1135 = vadd.f32 %v1131, %v802
    %v1136 = vadd.f32 %v1132, %v808
    %v1137 = vmax.f32 %v1133, 0.0
    %v1138 = vmax.f32 %v1134, 0.0
    %v1139 = vmax.f32 %v1135, 0.0
    %v1140 = vmax.f32 %v1136, 0.0
    %s1141 = scalar_lea.vmem [#allocation2], 32
    %1142 = vst [vmem:[%s1141] sm:$0xff] %v1137
    %1143 = vst [vmem:[%s1141 + $0x8] sm:$0xff] %v1138
    %1144 = vst [vmem:[%s1141 + $0x10] sm:$0xff] %v1139
    %1145 = vst [vmem:[%s1141 + $0x18] sm:$0xff] %v1140
    // Predicated region
    $region50: #{tpu_custom_call.1} parent=1 // pred_check
      _
    $region51: #{tpu_custom_call.1} parent=1 // pred_check_branch
      %1147 = sbr.rel (0) target = $region53
    $region52: #{tpu_custom_call.1} parent=1 // pred_region
      %s1149 = ssub.s32 1024, 1024
      %1150 = vsyncadd [#allocation3], %s1149
      %s1151 = sshll.u32 [#allocation2], 4
      %s1152 = int_to_ptr.vmem [resolvable:$true] %s1151
      %1157 = dma.vmem_to_hbm [thread:$0]  %s1152, 1024, %s12, [#allocation3], 128, 128, 8
    $region53: #{tpu_custom_call.1} parent=1 // pred_fallthru
      _
    // Predicated region
    $region54: #{tpu_custom_call.1} parent=1 // pred_check
      _
    $region55: #{tpu_custom_call.1} parent=1 // pred_check_branch
      %1159 = sbr.rel (0) target = $region57
    $region56: #{tpu_custom_call.1} parent=1 // pred_region
      %1160 = dma.done [#allocation3], 1024
    $region57: #{tpu_custom_call.1} parent=1 // pred_fallthru
      _
    %1161 = vsyncpa [#allocation3], 1

</llo_original>
